<compile_context>
chip_gen: v7x
topology: tpu7x:2x2x1
jax: 0.10.0
libtpu: 0.0.40
codegen_flags: <defaults>
</compile_context>

<pallas_src>
import jax
import jax.numpy as jnp
from jax.experimental import pallas as pl
from jax.experimental.pallas import tpu as pltpu


def _round_up(x, m):
    return (x + m - 1) // m * m


def _lstm_cls_kernel(len_ref, xw_ref, whh_ref, wout_ref, bout_ref, out_ref,
                     h_scr, c_scr, last_scr):
    """One grid step = one (batch_tile, time_chunk).

    len_ref  : (tb, 1) int32    sequence lengths for this batch tile
    xw_ref   : (tc, tb, 4*Hp)   precomputed x @ W_ih + bias for this time chunk
    whh_ref  : (Hp, 4*Hp)       recurrent weights
    wout_ref : (Hp, Cp)         classifier weights
    bout_ref : (1, Cp)          classifier bias
    out_ref  : (tb, Cp)         logits (written on the last time chunk)
    h/c/last : (tb, Hp) f32 VMEM scratch, persistent across time chunks
    """
    t_chunk = pl.program_id(1)

    @pl.when(t_chunk == 0)
    def _():
        h_scr[...] = jnp.zeros_like(h_scr)
        c_scr[...] = jnp.zeros_like(c_scr)
        last_scr[...] = jnp.zeros_like(last_scr)

    tc = xw_ref.shape[0]
    Hp = h_scr.shape[1]
    whh = whh_ref[...]                    # pinned for the whole chunk
    len_col = len_ref[...]                # (tb, 1) int32
    t_base = t_chunk * tc

    def step(s, carry):
        h, c, last = carry
        # x-side projection was hoisted; only the recurrent matmul runs here.
        gates = xw_ref[s] + jnp.dot(h, whh, preferred_element_type=jnp.float32)
        i_g = jax.nn.sigmoid(gates[:, 0 * Hp:1 * Hp])   # lane-aligned slices
        f_g = jax.nn.sigmoid(gates[:, 1 * Hp:2 * Hp])
        g_g = jnp.tanh(gates[:, 2 * Hp:3 * Hp])
        o_g = jax.nn.sigmoid(gates[:, 3 * Hp:4 * Hp])
        c = f_g * c + i_g * g_g
        h = o_g * jnp.tanh(c)
        # Latch h at t == lengths[b] - 1 (pack/pad_packed + gather equivalent).
        # Rows with length 0 (or > T) never latch and keep zeros.
        latch = len_col == (t_base + s + 1)
        last = jnp.where(latch, h, last)
        return h, c, last

    unroll = True if tc <= 32 else 8
    h, c, last = jax.lax.fori_loop(
        0, tc, step, (h_scr[...], c_scr[...], last_scr[...]), unroll=unroll)
    h_scr[...] = h
    c_scr[...] = c
    last_scr[...] = last

    @pl.when(t_chunk == pl.num_programs(1) - 1)
    def _():
        out_ref[...] = (jnp.dot(last, wout_ref[...],
                                preferred_element_type=jnp.float32)
                        + bout_ref[...])


@jax.jit
def sentence_classifier_forward(captions, lengths, params):
    """captions: [B, T] int32, lengths: [B] int32 -> logits [B, C]."""
    emb_w = params["embed"]        # [V, E]
    w_ih = params["w_ih"]          # [E, 4H]
    w_hh = params["w_hh"]          # [H, 4H]
    b = params["b"]                # [1, 4H] (bias_ih + bias_hh)
    w_out = params["w_out"]        # [H, C]
    b_out = params["b_out"]        # [1, C]

    B, T = captions.shape
    E = emb_w.shape[1]
    H = w_hh.shape[0]
    C = w_out.shape[1]

    # ---- pad to TPU-friendly shapes (lane = 128, sublane = 8) --------------
    Hp = _round_up(H, 128)
    Cp = _round_up(C, 128)
    Bp = _round_up(B, 8)
    tb = Bp if Bp <= 256 else 256
    Bp = _round_up(Bp, tb)

    def pad_gate_cols(w, h, hp):   # last dim 4*h (i,f,g,o) -> 4*hp, per gate
        if hp == h:
            return w
        w4 = w.reshape(w.shape[:-1] + (4, h))
        w4 = jnp.pad(w4, [(0, 0)] * (w4.ndim - 1) + [(0, hp - h)])
        return w4.reshape(w.shape[:-1] + (4 * hp,))

    w_ih_p = pad_gate_cols(w_ih, H, Hp)                                # [E, 4Hp]
    w_hh_p = pad_gate_cols(jnp.pad(w_hh, ((0, Hp - H), (0, 0))), H, Hp)  # [Hp,4Hp]
    b_p = pad_gate_cols(b, H, Hp)                                      # [1, 4Hp]
    w_out_p = jnp.pad(w_out, ((0, Hp - H), (0, Cp - C)))               # [Hp, Cp]
    b_out_p = jnp.pad(b_out, ((0, 0), (0, Cp - C)))                    # [1, Cp]

    cap_p = jnp.pad(captions.astype(jnp.int32), ((0, Bp - B), (0, 0)))
    len_p = jnp.pad(lengths.astype(jnp.int32), (0, Bp - B),
                    constant_values=1).reshape(Bp, 1)

    # ---- hoisted input projection: one big MXU-friendly matmul -------------
    # Gather time-major directly (transpose only the cheap int32 id matrix).
    x_tm = jnp.take(emb_w, cap_p.T, axis=0).astype(jnp.float32)       # [T,Bp,E]
    # TODO(synk): training-mode dropout (p=0.5) not implemented; this kernel
    # reproduces eval/inference semantics where dropout is identity.
    xw = (x_tm.reshape(T * Bp, E) @ w_ih_p + b_p).reshape(T, Bp, 4 * Hp)

    # ---- time chunking: keep one (tc, tb, 4Hp) f32 slab small in VMEM ------
    bytes_per_step = tb * 4 * Hp * 4
    tc = max(1, min(T, (4 * 1024 * 1024) // bytes_per_step))
    Tp = _round_up(T, tc)
    if Tp != T:
        # Padded steps run after every latch, so they cannot affect the result.
        xw = jnp.pad(xw, ((0, Tp - T), (0, 0), (0, 0)))

    nb, nt = Bp // tb, Tp // tc

    out_p = pl.pallas_call(
        _lstm_cls_kernel,
        out_shape=jax.ShapeDtypeStruct((Bp, Cp), jnp.float32),
        grid_spec=pltpu.PrefetchScalarGridSpec(
            num_scalar_prefetch=0,
            grid=(nb, nt),
            in_specs=[
                pl.BlockSpec((tb, 1), lambda bi, ti: (bi, 0)),             # lengths
                pl.BlockSpec((tc, tb, 4 * Hp), lambda bi, ti: (ti, bi, 0)),  # xW chunk
                pl.BlockSpec((Hp, 4 * Hp), lambda bi, ti: (0, 0)),         # W_hh
                pl.BlockSpec((Hp, Cp), lambda bi, ti: (0, 0)),             # W_out
                pl.BlockSpec((1, Cp), lambda bi, ti: (0, 0)),              # b_out
            ],
            out_specs=pl.BlockSpec((tb, Cp), lambda bi, ti: (bi, 0)),
            scratch_shapes=[
                pltpu.VMEM((tb, Hp), jnp.float32),   # h
                pltpu.VMEM((tb, Hp), jnp.float32),   # c
                pltpu.VMEM((tb, Hp), jnp.float32),   # latched last hidden
            ],
        ),
        compiler_params=pltpu.CompilerParams(
            # batch tiles are independent (megacore / v7x 2-TC sharding);
            # the time recurrence is sequential.
            dimension_semantics=("parallel", "arbitrary")),
    )(len_p, xw, w_hh_p, w_out_p, b_out_p)

    return out_p[:B, :C]


def _reference_forward(captions, lengths, params):
    """Pure-JAX reference (LSTM via lax.scan) for a correctness check."""
    emb_w, w_ih, w_hh, b = (params["embed"], params["w_ih"],
                            params["w_hh"], params["b"])
    w_out, b_out = params["w_out"], params["b_out"]
    B, T = captions.shape
    H = w_hh.shape[0]
    x = jnp.take(emb_w, captions, axis=0)          # [B, T, E]

    def step(carry, x_t):
        h, c = carry
        gates = x_t @ w_ih + h @ w_hh + b[0]
        i_g = jax.nn.sigmoid(gates[:, 0 * H:1 * H])
        f_g = jax.nn.sigmoid(gates[:, 1 * H:2 * H])
        g_g = jnp.tanh(gates[:, 2 * H:3 * H])
        o_g = jax.nn.sigmoid(gates[:, 3 * H:4 * H])
        c = f_g * c + i_g * g_g
        h = o_g * jnp.tanh(c)
        return (h, c), h

    init = (jnp.zeros((B, H), jnp.float32), jnp.zeros((B, H), jnp.float32))
    _, hs = jax.lax.scan(step, init, jnp.transpose(x, (1, 0, 2)))  # [T, B, H]
    hs = jnp.transpose(hs, (1, 0, 2))                              # [B, T, H]
    last = hs[jnp.arange(B), lengths - 1]                          # [B, H]
    return last @ w_out + b_out[0]


def init_params(key, vocab_size, word_embed_size, hidden_size, num_classes):
    """Mirrors the PyTorch module's init: embedding / linear uniform(-0.1,0.1),
    linear bias 0, LSTM params uniform(-1/sqrt(H), 1/sqrt(H)); the two LSTM
    biases (b_ih, b_hh) are independent uniforms summed into one."""
    V, E, H, C = vocab_size, word_embed_size, hidden_size, num_classes
    k_emb, k_ih, k_hh, k_bih, k_bhh, k_out = jax.random.split(key, 6)
    s = 1.0 / float(H) ** 0.5
    return {
        "embed": jax.random.uniform(k_emb, (V, E), jnp.float32, -0.1, 0.1),
        # Pre-transposed vs. PyTorch weight_ih_l0 [4H,E] / weight_hh_l0 [4H,H];
        # gate order (i, f, g, o) along the 4H axis.
        "w_ih": jax.random.uniform(k_ih, (E, 4 * H), jnp.float32, -s, s),
        "w_hh": jax.random.uniform(k_hh, (H, 4 * H), jnp.float32, -s, s),
        "b": (jax.random.uniform(k_bih, (1, 4 * H), jnp.float32, -s, s)
              + jax.random.uniform(k_bhh, (1, 4 * H), jnp.float32, -s, s)),
        "w_out": jax.random.uniform(k_out, (H, C), jnp.float32, -0.1, 0.1),
        "b_out": jnp.zeros((1, C), jnp.float32),
    }


if __name__ == "__main__":
    # Small shapes consistent with the module's forward.
    vocab_size, word_embed_size, hidden_size, num_classes = 50, 32, 32, 8
    B, T = 2, 8

    key = jax.random.PRNGKey(0)
    params = init_params(key, vocab_size, word_embed_size, hidden_size,
                         num_classes)

    cap_key, _ = jax.random.split(key)
    captions = jax.random.randint(cap_key, (B, T), 1, vocab_size,
                                  dtype=jnp.int32)
    lengths = jnp.array([T, 5], dtype=jnp.int32)  # sorted desc, like pack_padded
    # zero-pad beyond each length (mirrors padded batch produced upstream)
    pad_mask = jnp.arange(T)[None, :] < lengths[:, None]
    captions = jnp.where(pad_mask, captions, 0)

    logits = sentence_classifier_forward(captions, lengths, params)
    jax.block_until_ready(logits)

    ref = _reference_forward(captions, lengths, params)
    assert logits.shape == (B, num_classes)
    assert jnp.allclose(logits, ref, atol=1e-4, rtol=1e-4), "mismatch vs reference"

    print("KERNEL_OK")
</pallas_src>

<mosaic_0001>
module attributes {stable_mosaic.version = 11 : i64} {
  func.func @_lstm_cls_kernel(%arg0: i32, %arg1: i32, %arg2: memref<8x1xi32, #tpu.memory_space<vmem>>, %arg3: memref<8x8x512xf32, #tpu.memory_space<vmem>>, %arg4: memref<128x512xf32, #tpu.memory_space<vmem>>, %arg5: memref<128x128xf32, #tpu.memory_space<vmem>>, %arg6: memref<1x128xf32, #tpu.memory_space<vmem>>, %arg7: memref<8x128xf32, #tpu.memory_space<vmem>>, %arg8: memref<8x128xf32, #tpu.memory_space<vmem>>, %arg9: memref<8x128xf32, #tpu.memory_space<vmem>>, %arg10: memref<8x128xf32, #tpu.memory_space<vmem>>) attributes {dimension_semantics = [#tpu.dimension_semantics<parallel>, #tpu.dimension_semantics<arbitrary>], iteration_bounds = array<i64: 1, 1>, scalar_prefetch = 0 : i64, scratch_operands = 3 : i64, tpu.core_type = #tpu.core_type<tc>, window_params = [{transform_indices = @transform_0, window_bounds = array<i64: 8, 1>}, {transform_indices = @transform_1, window_bounds = array<i64: 8, 8, 512>}, {pipeline_mode = #tpu.pipeline_mode<synchronous>, transform_indices = @transform_2, window_bounds = array<i64: 128, 512>}, {pipeline_mode = #tpu.pipeline_mode<synchronous>, transform_indices = @transform_3, window_bounds = array<i64: 128, 128>}, {pipeline_mode = #tpu.pipeline_mode<synchronous>, transform_indices = @transform_4, window_bounds = array<i64: 1, 128>}, {transform_indices = @transform_5, window_bounds = array<i64: 8, 128>}]} {
    %c0_i32 = arith.constant 0 : i32
    %0 = arith.cmpi eq, %arg1, %c0_i32 : i32
    %1 = arith.extui %0 : i1 to i32
    %c0_i32_0 = arith.constant 0 : i32
    %2 = arith.cmpi ne, %1, %c0_i32_0 : i32
    scf.if %2 {
      %cst_75 = arith.constant 0.000000e+00 : f32
      %311 = vector.broadcast %cst_75 : f32 to vector<8x128xf32>
      %c0_76 = arith.constant 0 : index
      %c0_77 = arith.constant 0 : index
      %312 = vector.load %arg8[%c0_76, %c0_77] : memref<8x128xf32, #tpu.memory_space<vmem>>, vector<8x128xf32>
      tpu.vector_store %arg8[%c0_76, %c0_77], %311 {strides = array<i32>} : memref<8x128xf32, #tpu.memory_space<vmem>>, vector<8x128xf32>,
      %cst_78 = arith.constant 0.000000e+00 : f32
      %313 = vector.broadcast %cst_78 : f32 to vector<8x128xf32>
      %c0_79 = arith.constant 0 : index
      %c0_80 = arith.constant 0 : index
      %314 = vector.load %arg9[%c0_79, %c0_80] : memref<8x128xf32, #tpu.memory_space<vmem>>, vector<8x128xf32>
      tpu.vector_store %arg9[%c0_79, %c0_80], %313 {strides = array<i32>} : memref<8x128xf32, #tpu.memory_space<vmem>>, vector<8x128xf32>,
      %cst_81 = arith.constant 0.000000e+00 : f32
      %315 = vector.broadcast %cst_81 : f32 to vector<8x128xf32>
      %c0_82 = arith.constant 0 : index
      %c0_83 = arith.constant 0 : index
      %316 = vector.load %arg10[%c0_82, %c0_83] : memref<8x128xf32, #tpu.memory_space<vmem>>, vector<8x128xf32>
      tpu.vector_store %arg10[%c0_82, %c0_83], %315 {strides = array<i32>} : memref<8x128xf32, #tpu.memory_space<vmem>>, vector<8x128xf32>,
    } else {
    }
    %c0 = arith.constant 0 : index
    %c0_1 = arith.constant 0 : index
    %3 = vector.load %arg4[%c0, %c0_1] : memref<128x512xf32, #tpu.memory_space<vmem>>, vector<128x512xf32>
    %c0_2 = arith.constant 0 : index
    %c0_3 = arith.constant 0 : index
    %4 = vector.load %arg2[%c0_2, %c0_3] : memref<8x1xi32, #tpu.memory_space<vmem>>, vector<8x1xi32>
    %c8_i32 = arith.constant 8 : i32
    %5 = arith.muli %arg1, %c8_i32 : i32
    %c0_4 = arith.constant 0 : index
    %c0_5 = arith.constant 0 : index
    %6 = vector.load %arg8[%c0_4, %c0_5] : memref<8x128xf32, #tpu.memory_space<vmem>>, vector<8x128xf32>
    %c0_6 = arith.constant 0 : index
    %c0_7 = arith.constant 0 : index
    %7 = vector.load %arg9[%c0_6, %c0_7] : memref<8x128xf32, #tpu.memory_space<vmem>>, vector<8x128xf32>
    %c0_8 = arith.constant 0 : index
    %c0_9 = arith.constant 0 : index
    %8 = vector.load %arg10[%c0_8, %c0_9] : memref<8x128xf32, #tpu.memory_space<vmem>>, vector<8x128xf32>
    %c0_i32_10 = arith.constant 0 : i32
    %9 = arith.index_cast %c0_i32_10 : i32 to index
    %c0_11 = arith.constant 0 : index
    %c0_12 = arith.constant 0 : index
    %10 = vector.load %arg3[%9, %c0_11, %c0_12] : memref<8x8x512xf32, #tpu.memory_space<vmem>>, vector<1x8x512xf32>
    %11 = vector.shape_cast %10 : vector<1x8x512xf32> to vector<8x512xf32>
    %cst = arith.constant dense<0.000000e+00> : vector<8x512xf32>
    %12 = tpu.matmul %6, %3, %cst {dimension_numbers = #tpu.dot_dimension_numbers<[1], [0], [0], [1], [0, 0, 1, 1], [], []>} : vector<8x128xf32>, vector<128x512xf32>, vector<8x512xf32> -> vector<8x512xf32>
    %13 = arith.addf %11, %12 : vector<8x512xf32>
    %14 = vector.extract_strided_slice %13 {offsets = [0, 0], sizes = [8, 128], strides = [1, 1]} : vector<8x512xf32> to vector<8x128xf32>
    %15 = arith.negf %14 : vector<8x128xf32>
    %16 = math.exp %15 : vector<8x128xf32>
    %cst_13 = arith.constant 1.000000e+00 : f32
    %17 = vector.broadcast %cst_13 : f32 to vector<8x128xf32>
    %18 = arith.addf %17, %16 : vector<8x128xf32>
    %19 = arith.divf %17, %18 : vector<8x128xf32>
    %20 = vector.extract_strided_slice %13 {offsets = [0, 128], sizes = [8, 128], strides = [1, 1]} : vector<8x512xf32> to vector<8x128xf32>
    %21 = arith.negf %20 : vector<8x128xf32>
    %22 = math.exp %21 : vector<8x128xf32>
    %cst_14 = arith.constant 1.000000e+00 : f32
    %23 = vector.broadcast %cst_14 : f32 to vector<8x128xf32>
    %24 = arith.addf %23, %22 : vector<8x128xf32>
    %25 = arith.divf %23, %24 : vector<8x128xf32>
    %26 = vector.extract_strided_slice %13 {offsets = [0, 256], sizes = [8, 128], strides = [1, 1]} : vector<8x512xf32> to vector<8x128xf32>
    %27 = math.tanh %26 : vector<8x128xf32>
    %28 = vector.extract_strided_slice %13 {offsets = [0, 384], sizes = [8, 128], strides = [1, 1]} : vector<8x512xf32> to vector<8x128xf32>
    %29 = arith.negf %28 : vector<8x128xf32>
    %30 = math.exp %29 : vector<8x128xf32>
    %cst_15 = arith.constant 1.000000e+00 : f32
    %31 = vector.broadcast %cst_15 : f32 to vector<8x128xf32>
    %32 = arith.addf %31, %30 : vector<8x128xf32>
    %33 = arith.divf %31, %32 : vector<8x128xf32>
    %34 = arith.mulf %25, %7 : vector<8x128xf32>
    %35 = arith.mulf %19, %27 : vector<8x128xf32>
    %36 = arith.addf %34, %35 : vector<8x128xf32>
    %37 = math.tanh %36 : vector<8x128xf32>
    %38 = arith.mulf %33, %37 : vector<8x128xf32>
    %39 = arith.addi %5, %c0_i32_10 : i32
    %c1_i32 = arith.constant 1 : i32
    %40 = arith.addi %39, %c1_i32 : i32
    %41 = vector.broadcast %40 : i32 to vector<8x1xi32>
    %42 = arith.cmpi eq, %4, %41 : vector<8x1xi32>
    %43 = vector.shape_cast %42 : vector<8x1xi1> to vector<8x1xi1>
    %44 = vector.broadcast %43 : vector<8x1xi1> to vector<8x128xi1>
    %45 = arith.select %44, %38, %8 : vector<8x128xi1>, vector<8x128xf32>
    %c1_i32_16 = arith.constant 1 : i32
    %46 = arith.index_cast %c1_i32_16 : i32 to index
    %c0_17 = arith.constant 0 : index
    %c0_18 = arith.constant 0 : index
    %47 = vector.load %arg3[%46, %c0_17, %c0_18] : memref<8x8x512xf32, #tpu.memory_space<vmem>>, vector<1x8x512xf32>
    %48 = vector.shape_cast %47 : vector<1x8x512xf32> to vector<8x512xf32>
    %cst_19 = arith.constant dense<0.000000e+00> : vector<8x512xf32>
    %49 = tpu.matmul %38, %3, %cst_19 {dimension_numbers = #tpu.dot_dimension_numbers<[1], [0], [0], [1], [0, 0, 1, 1], [], []>} : vector<8x128xf32>, vector<128x512xf32>, vector<8x512xf32> -> vector<8x512xf32>
    %50 = arith.addf %48, %49 : vector<8x512xf32>
    %51 = vector.extract_strided_slice %50 {offsets = [0, 0], sizes = [8, 128], strides = [1, 1]} : vector<8x512xf32> to vector<8x128xf32>
    %52 = arith.negf %51 : vector<8x128xf32>
    %53 = math.exp %52 : vector<8x128xf32>
    %cst_20 = arith.constant 1.000000e+00 : f32
    %54 = vector.broadcast %cst_20 : f32 to vector<8x128xf32>
    %55 = arith.addf %54, %53 : vector<8x128xf32>
    %56 = arith.divf %54, %55 : vector<8x128xf32>
    %57 = vector.extract_strided_slice %50 {offsets = [0, 128], sizes = [8, 128], strides = [1, 1]} : vector<8x512xf32> to vector<8x128xf32>
    %58 = arith.negf %57 : vector<8x128xf32>
    %59 = math.exp %58 : vector<8x128xf32>
    %cst_21 = arith.constant 1.000000e+00 : f32
    %60 = vector.broadcast %cst_21 : f32 to vector<8x128xf32>
    %61 = arith.addf %60, %59 : vector<8x128xf32>
    %62 = arith.divf %60, %61 : vector<8x128xf32>
    %63 = vector.extract_strided_slice %50 {offsets = [0, 256], sizes = [8, 128], strides = [1, 1]} : vector<8x512xf32> to vector<8x128xf32>
    %64 = math.tanh %63 : vector<8x128xf32>
    %65 = vector.extract_strided_slice %50 {offsets = [0, 384], sizes = [8, 128], strides = [1, 1]} : vector<8x512xf32> to vector<8x128xf32>
    %66 = arith.negf %65 : vector<8x128xf32>
    %67 = math.exp %66 : vector<8x128xf32>
    %cst_22 = arith.constant 1.000000e+00 : f32
    %68 = vector.broadcast %cst_22 : f32 to vector<8x128xf32>
    %69 = arith.addf %68, %67 : vector<8x128xf32>
    %70 = arith.divf %68, %69 : vector<8x128xf32>
    %71 = arith.mulf %62, %36 : vector<8x128xf32>
    %72 = arith.mulf %56, %64 : vector<8x128xf32>
    %73 = arith.addf %71, %72 : vector<8x128xf32>
    %74 = math.tanh %73 : vector<8x128xf32>
    %75 = arith.mulf %70, %74 : vector<8x128xf32>
    %76 = arith.addi %5, %c1_i32_16 : i32
    %c1_i32_23 = arith.constant 1 : i32
    %77 = arith.addi %76, %c1_i32_23 : i32
    %78 = vector.broadcast %77 : i32 to vector<8x1xi32>
    %79 = arith.cmpi eq, %4, %78 : vector<8x1xi32>
    %80 = vector.shape_cast %79 : vector<8x1xi1> to vector<8x1xi1>
    %81 = vector.broadcast %80 : vector<8x1xi1> to vector<8x128xi1>
    %82 = arith.select %81, %75, %45 : vector<8x128xi1>, vector<8x128xf32>
    %c2_i32 = arith.constant 2 : i32
    %83 = arith.index_cast %c2_i32 : i32 to index
    %c0_24 = arith.constant 0 : index
    %c0_25 = arith.constant 0 : index
    %84 = vector.load %arg3[%83, %c0_24, %c0_25] : memref<8x8x512xf32, #tpu.memory_space<vmem>>, vector<1x8x512xf32>
    %85 = vector.shape_cast %84 : vector<1x8x512xf32> to vector<8x512xf32>
    %cst_26 = arith.constant dense<0.000000e+00> : vector<8x512xf32>
    %86 = tpu.matmul %75, %3, %cst_26 {dimension_numbers = #tpu.dot_dimension_numbers<[1], [0], [0], [1], [0, 0, 1, 1], [], []>} : vector<8x128xf32>, vector<128x512xf32>, vector<8x512xf32> -> vector<8x512xf32>
    %87 = arith.addf %85, %86 : vector<8x512xf32>
    %88 = vector.extract_strided_slice %87 {offsets = [0, 0], sizes = [8, 128], strides = [1, 1]} : vector<8x512xf32> to vector<8x128xf32>
    %89 = arith.negf %88 : vector<8x128xf32>
    %90 = math.exp %89 : vector<8x128xf32>
    %cst_27 = arith.constant 1.000000e+00 : f32
    %91 = vector.broadcast %cst_27 : f32 to vector<8x128xf32>
    %92 = arith.addf %91, %90 : vector<8x128xf32>
    %93 = arith.divf %91, %92 : vector<8x128xf32>
    %94 = vector.extract_strided_slice %87 {offsets = [0, 128], sizes = [8, 128], strides = [1, 1]} : vector<8x512xf32> to vector<8x128xf32>
    %95 = arith.negf %94 : vector<8x128xf32>
    %96 = math.exp %95 : vector<8x128xf32>
    %cst_28 = arith.constant 1.000000e+00 : f32
    %97 = vector.broadcast %cst_28 : f32 to vector<8x128xf32>
    %98 = arith.addf %97, %96 : vector<8x128xf32>
    %99 = arith.divf %97, %98 : vector<8x128xf32>
    %100 = vector.extract_strided_slice %87 {offsets = [0, 256], sizes = [8, 128], strides = [1, 1]} : vector<8x512xf32> to vector<8x128xf32>
    %101 = math.tanh %100 : vector<8x128xf32>
    %102 = vector.extract_strided_slice %87 {offsets = [0, 384], sizes = [8, 128], strides = [1, 1]} : vector<8x512xf32> to vector<8x128xf32>
    %103 = arith.negf %102 : vector<8x128xf32>
    %104 = math.exp %103 : vector<8x128xf32>
    %cst_29 = arith.constant 1.000000e+00 : f32
    %105 = vector.broadcast %cst_29 : f32 to vector<8x128xf32>
    %106 = arith.addf %105, %104 : vector<8x128xf32>
    %107 = arith.divf %105, %106 : vector<8x128xf32>
    %108 = arith.mulf %99, %73 : vector<8x128xf32>
    %109 = arith.mulf %93, %101 : vector<8x128xf32>
    %110 = arith.addf %108, %109 : vector<8x128xf32>
    %111 = math.tanh %110 : vector<8x128xf32>
    %112 = arith.mulf %107, %111 : vector<8x128xf32>
    %113 = arith.addi %5, %c2_i32 : i32
    %c1_i32_30 = arith.constant 1 : i32
    %114 = arith.addi %113, %c1_i32_30 : i32
    %115 = vector.broadcast %114 : i32 to vector<8x1xi32>
    %116 = arith.cmpi eq, %4, %115 : vector<8x1xi32>
    %117 = vector.shape_cast %116 : vector<8x1xi1> to vector<8x1xi1>
    %118 = vector.broadcast %117 : vector<8x1xi1> to vector<8x128xi1>
    %119 = arith.select %118, %112, %82 : vector<8x128xi1>, vector<8x128xf32>
    %c3_i32 = arith.constant 3 : i32
    %120 = arith.index_cast %c3_i32 : i32 to index
    %c0_31 = arith.constant 0 : index
    %c0_32 = arith.constant 0 : index
    %121 = vector.load %arg3[%120, %c0_31, %c0_32] : memref<8x8x512xf32, #tpu.memory_space<vmem>>, vector<1x8x512xf32>
    %122 = vector.shape_cast %121 : vector<1x8x512xf32> to vector<8x512xf32>
    %cst_33 = arith.constant dense<0.000000e+00> : vector<8x512xf32>
    %123 = tpu.matmul %112, %3, %cst_33 {dimension_numbers = #tpu.dot_dimension_numbers<[1], [0], [0], [1], [0, 0, 1, 1], [], []>} : vector<8x128xf32>, vector<128x512xf32>, vector<8x512xf32> -> vector<8x512xf32>
    %124 = arith.addf %122, %123 : vector<8x512xf32>
    %125 = vector.extract_strided_slice %124 {offsets = [0, 0], sizes = [8, 128], strides = [1, 1]} : vector<8x512xf32> to vector<8x128xf32>
    %126 = arith.negf %125 : vector<8x128xf32>
    %127 = math.exp %126 : vector<8x128xf32>
    %cst_34 = arith.constant 1.000000e+00 : f32
    %128 = vector.broadcast %cst_34 : f32 to vector<8x128xf32>
    %129 = arith.addf %128, %127 : vector<8x128xf32>
    %130 = arith.divf %128, %129 : vector<8x128xf32>
    %131 = vector.extract_strided_slice %124 {offsets = [0, 128], sizes = [8, 128], strides = [1, 1]} : vector<8x512xf32> to vector<8x128xf32>
    %132 = arith.negf %131 : vector<8x128xf32>
    %133 = math.exp %132 : vector<8x128xf32>
    %cst_35 = arith.constant 1.000000e+00 : f32
    %134 = vector.broadcast %cst_35 : f32 to vector<8x128xf32>
    %135 = arith.addf %134, %133 : vector<8x128xf32>
    %136 = arith.divf %134, %135 : vector<8x128xf32>
    %137 = vector.extract_strided_slice %124 {offsets = [0, 256], sizes = [8, 128], strides = [1, 1]} : vector<8x512xf32> to vector<8x128xf32>
    %138 = math.tanh %137 : vector<8x128xf32>
    %139 = vector.extract_strided_slice %124 {offsets = [0, 384], sizes = [8, 128], strides = [1, 1]} : vector<8x512xf32> to vector<8x128xf32>
    %140 = arith.negf %139 : vector<8x128xf32>
    %141 = math.exp %140 : vector<8x128xf32>
    %cst_36 = arith.constant 1.000000e+00 : f32
    %142 = vector.broadcast %cst_36 : f32 to vector<8x128xf32>
    %143 = arith.addf %142, %141 : vector<8x128xf32>
    %144 = arith.divf %142, %143 : vector<8x128xf32>
    %145 = arith.mulf %136, %110 : vector<8x128xf32>
    %146 = arith.mulf %130, %138 : vector<8x128xf32>
    %147 = arith.addf %145, %146 : vector<8x128xf32>
    %148 = math.tanh %147 : vector<8x128xf32>
    %149 = arith.mulf %144, %148 : vector<8x128xf32>
    %150 = arith.addi %5, %c3_i32 : i32
    %c1_i32_37 = arith.constant 1 : i32
    %151 = arith.addi %150, %c1_i32_37 : i32
    %152 = vector.broadcast %151 : i32 to vector<8x1xi32>
    %153 = arith.cmpi eq, %4, %152 : vector<8x1xi32>
    %154 = vector.shape_cast %153 : vector<8x1xi1> to vector<8x1xi1>
    %155 = vector.broadcast %154 : vector<8x1xi1> to vector<8x128xi1>
    %156 = arith.select %155, %149, %119 : vector<8x128xi1>, vector<8x128xf32>
    %c4_i32 = arith.constant 4 : i32
    %157 = arith.index_cast %c4_i32 : i32 to index
    %c0_38 = arith.constant 0 : index
    %c0_39 = arith.constant 0 : index
    %158 = vector.load %arg3[%157, %c0_38, %c0_39] : memref<8x8x512xf32, #tpu.memory_space<vmem>>, vector<1x8x512xf32>
    %159 = vector.shape_cast %158 : vector<1x8x512xf32> to vector<8x512xf32>
    %cst_40 = arith.constant dense<0.000000e+00> : vector<8x512xf32>
    %160 = tpu.matmul %149, %3, %cst_40 {dimension_numbers = #tpu.dot_dimension_numbers<[1], [0], [0], [1], [0, 0, 1, 1], [], []>} : vector<8x128xf32>, vector<128x512xf32>, vector<8x512xf32> -> vector<8x512xf32>
    %161 = arith.addf %159, %160 : vector<8x512xf32>
    %162 = vector.extract_strided_slice %161 {offsets = [0, 0], sizes = [8, 128], strides = [1, 1]} : vector<8x512xf32> to vector<8x128xf32>
    %163 = arith.negf %162 : vector<8x128xf32>
    %164 = math.exp %163 : vector<8x128xf32>
    %cst_41 = arith.constant 1.000000e+00 : f32
    %165 = vector.broadcast %cst_41 : f32 to vector<8x128xf32>
    %166 = arith.addf %165, %164 : vector<8x128xf32>
    %167 = arith.divf %165, %166 : vector<8x128xf32>
    %168 = vector.extract_strided_slice %161 {offsets = [0, 128], sizes = [8, 128], strides = [1, 1]} : vector<8x512xf32> to vector<8x128xf32>
    %169 = arith.negf %168 : vector<8x128xf32>
    %170 = math.exp %169 : vector<8x128xf32>
    %cst_42 = arith.constant 1.000000e+00 : f32
    %171 = vector.broadcast %cst_42 : f32 to vector<8x128xf32>
    %172 = arith.addf %171, %170 : vector<8x128xf32>
    %173 = arith.divf %171, %172 : vector<8x128xf32>
    %174 = vector.extract_strided_slice %161 {offsets = [0, 256], sizes = [8, 128], strides = [1, 1]} : vector<8x512xf32> to vector<8x128xf32>
    %175 = math.tanh %174 : vector<8x128xf32>
    %176 = vector.extract_strided_slice %161 {offsets = [0, 384], sizes = [8, 128], strides = [1, 1]} : vector<8x512xf32> to vector<8x128xf32>
    %177 = arith.negf %176 : vector<8x128xf32>
    %178 = math.exp %177 : vector<8x128xf32>
    %cst_43 = arith.constant 1.000000e+00 : f32
    %179 = vector.broadcast %cst_43 : f32 to vector<8x128xf32>
    %180 = arith.addf %179, %178 : vector<8x128xf32>
    %181 = arith.divf %179, %180 : vector<8x128xf32>
    %182 = arith.mulf %173, %147 : vector<8x128xf32>
    %183 = arith.mulf %167, %175 : vector<8x128xf32>
    %184 = arith.addf %182, %183 : vector<8x128xf32>
    %185 = math.tanh %184 : vector<8x128xf32>
    %186 = arith.mulf %181, %185 : vector<8x128xf32>
    %187 = arith.addi %5, %c4_i32 : i32
    %c1_i32_44 = arith.constant 1 : i32
    %188 = arith.addi %187, %c1_i32_44 : i32
    %189 = vector.broadcast %188 : i32 to vector<8x1xi32>
    %190 = arith.cmpi eq, %4, %189 : vector<8x1xi32>
    %191 = vector.shape_cast %190 : vector<8x1xi1> to vector<8x1xi1>
    %192 = vector.broadcast %191 : vector<8x1xi1> to vector<8x128xi1>
    %193 = arith.select %192, %186, %156 : vector<8x128xi1>, vector<8x128xf32>
    %c5_i32 = arith.constant 5 : i32
    %194 = arith.index_cast %c5_i32 : i32 to index
    %c0_45 = arith.constant 0 : index
    %c0_46 = arith.constant 0 : index
    %195 = vector.load %arg3[%194, %c0_45, %c0_46] : memref<8x8x512xf32, #tpu.memory_space<vmem>>, vector<1x8x512xf32>
    %196 = vector.shape_cast %195 : vector<1x8x512xf32> to vector<8x512xf32>
    %cst_47 = arith.constant dense<0.000000e+00> : vector<8x512xf32>
    %197 = tpu.matmul %186, %3, %cst_47 {dimension_numbers = #tpu.dot_dimension_numbers<[1], [0], [0], [1], [0, 0, 1, 1], [], []>} : vector<8x128xf32>, vector<128x512xf32>, vector<8x512xf32> -> vector<8x512xf32>
    %198 = arith.addf %196, %197 : vector<8x512xf32>
    %199 = vector.extract_strided_slice %198 {offsets = [0, 0], sizes = [8, 128], strides = [1, 1]} : vector<8x512xf32> to vector<8x128xf32>
    %200 = arith.negf %199 : vector<8x128xf32>
    %201 = math.exp %200 : vector<8x128xf32>
    %cst_48 = arith.constant 1.000000e+00 : f32
    %202 = vector.broadcast %cst_48 : f32 to vector<8x128xf32>
    %203 = arith.addf %202, %201 : vector<8x128xf32>
    %204 = arith.divf %202, %203 : vector<8x128xf32>
    %205 = vector.extract_strided_slice %198 {offsets = [0, 128], sizes = [8, 128], strides = [1, 1]} : vector<8x512xf32> to vector<8x128xf32>
    %206 = arith.negf %205 : vector<8x128xf32>
    %207 = math.exp %206 : vector<8x128xf32>
    %cst_49 = arith.constant 1.000000e+00 : f32
    %208 = vector.broadcast %cst_49 : f32 to vector<8x128xf32>
    %209 = arith.addf %208, %207 : vector<8x128xf32>
    %210 = arith.divf %208, %209 : vector<8x128xf32>
    %211 = vector.extract_strided_slice %198 {offsets = [0, 256], sizes = [8, 128], strides = [1, 1]} : vector<8x512xf32> to vector<8x128xf32>
    %212 = math.tanh %211 : vector<8x128xf32>
    %213 = vector.extract_strided_slice %198 {offsets = [0, 384], sizes = [8, 128], strides = [1, 1]} : vector<8x512xf32> to vector<8x128xf32>
    %214 = arith.negf %213 : vector<8x128xf32>
    %215 = math.exp %214 : vector<8x128xf32>
    %cst_50 = arith.constant 1.000000e+00 : f32
    %216 = vector.broadcast %cst_50 : f32 to vector<8x128xf32>
    %217 = arith.addf %216, %215 : vector<8x128xf32>
    %218 = arith.divf %216, %217 : vector<8x128xf32>
    %219 = arith.mulf %210, %184 : vector<8x128xf32>
    %220 = arith.mulf %204, %212 : vector<8x128xf32>
    %221 = arith.addf %219, %220 : vector<8x128xf32>
    %222 = math.tanh %221 : vector<8x128xf32>
    %223 = arith.mulf %218, %222 : vector<8x128xf32>
    %224 = arith.addi %5, %c5_i32 : i32
    %c1_i32_51 = arith.constant 1 : i32
    %225 = arith.addi %224, %c1_i32_51 : i32
    %226 = vector.broadcast %225 : i32 to vector<8x1xi32>
    %227 = arith.cmpi eq, %4, %226 : vector<8x1xi32>
    %228 = vector.shape_cast %227 : vector<8x1xi1> to vector<8x1xi1>
    %229 = vector.broadcast %228 : vector<8x1xi1> to vector<8x128xi1>
    %230 = arith.select %229, %223, %193 : vector<8x128xi1>, vector<8x128xf32>
    %c6_i32 = arith.constant 6 : i32
    %231 = arith.index_cast %c6_i32 : i32 to index
    %c0_52 = arith.constant 0 : index
    %c0_53 = arith.constant 0 : index
    %232 = vector.load %arg3[%231, %c0_52, %c0_53] : memref<8x8x512xf32, #tpu.memory_space<vmem>>, vector<1x8x512xf32>
    %233 = vector.shape_cast %232 : vector<1x8x512xf32> to vector<8x512xf32>
    %cst_54 = arith.constant dense<0.000000e+00> : vector<8x512xf32>
    %234 = tpu.matmul %223, %3, %cst_54 {dimension_numbers = #tpu.dot_dimension_numbers<[1], [0], [0], [1], [0, 0, 1, 1], [], []>} : vector<8x128xf32>, vector<128x512xf32>, vector<8x512xf32> -> vector<8x512xf32>
    %235 = arith.addf %233, %234 : vector<8x512xf32>
    %236 = vector.extract_strided_slice %235 {offsets = [0, 0], sizes = [8, 128], strides = [1, 1]} : vector<8x512xf32> to vector<8x128xf32>
    %237 = arith.negf %236 : vector<8x128xf32>
    %238 = math.exp %237 : vector<8x128xf32>
    %cst_55 = arith.constant 1.000000e+00 : f32
    %239 = vector.broadcast %cst_55 : f32 to vector<8x128xf32>
    %240 = arith.addf %239, %238 : vector<8x128xf32>
    %241 = arith.divf %239, %240 : vector<8x128xf32>
    %242 = vector.extract_strided_slice %235 {offsets = [0, 128], sizes = [8, 128], strides = [1, 1]} : vector<8x512xf32> to vector<8x128xf32>
    %243 = arith.negf %242 : vector<8x128xf32>
    %244 = math.exp %243 : vector<8x128xf32>
    %cst_56 = arith.constant 1.000000e+00 : f32
    %245 = vector.broadcast %cst_56 : f32 to vector<8x128xf32>
    %246 = arith.addf %245, %244 : vector<8x128xf32>
    %247 = arith.divf %245, %246 : vector<8x128xf32>
    %248 = vector.extract_strided_slice %235 {offsets = [0, 256], sizes = [8, 128], strides = [1, 1]} : vector<8x512xf32> to vector<8x128xf32>
    %249 = math.tanh %248 : vector<8x128xf32>
    %250 = vector.extract_strided_slice %235 {offsets = [0, 384], sizes = [8, 128], strides = [1, 1]} : vector<8x512xf32> to vector<8x128xf32>
    %251 = arith.negf %250 : vector<8x128xf32>
    %252 = math.exp %251 : vector<8x128xf32>
    %cst_57 = arith.constant 1.000000e+00 : f32
    %253 = vector.broadcast %cst_57 : f32 to vector<8x128xf32>
    %254 = arith.addf %253, %252 : vector<8x128xf32>
    %255 = arith.divf %253, %254 : vector<8x128xf32>
    %256 = arith.mulf %247, %221 : vector<8x128xf32>
    %257 = arith.mulf %241, %249 : vector<8x128xf32>
    %258 = arith.addf %256, %257 : vector<8x128xf32>
    %259 = math.tanh %258 : vector<8x128xf32>
    %260 = arith.mulf %255, %259 : vector<8x128xf32>
    %261 = arith.addi %5, %c6_i32 : i32
    %c1_i32_58 = arith.constant 1 : i32
    %262 = arith.addi %261, %c1_i32_58 : i32
    %263 = vector.broadcast %262 : i32 to vector<8x1xi32>
    %264 = arith.cmpi eq, %4, %263 : vector<8x1xi32>
    %265 = vector.shape_cast %264 : vector<8x1xi1> to vector<8x1xi1>
    %266 = vector.broadcast %265 : vector<8x1xi1> to vector<8x128xi1>
    %267 = arith.select %266, %260, %230 : vector<8x128xi1>, vector<8x128xf32>
    %c7_i32 = arith.constant 7 : i32
    %268 = arith.index_cast %c7_i32 : i32 to index
    %c0_59 = arith.constant 0 : index
    %c0_60 = arith.constant 0 : index
    %269 = vector.load %arg3[%268, %c0_59, %c0_60] : memref<8x8x512xf32, #tpu.memory_space<vmem>>, vector<1x8x512xf32>
    %270 = vector.shape_cast %269 : vector<1x8x512xf32> to vector<8x512xf32>
    %cst_61 = arith.constant dense<0.000000e+00> : vector<8x512xf32>
    %271 = tpu.matmul %260, %3, %cst_61 {dimension_numbers = #tpu.dot_dimension_numbers<[1], [0], [0], [1], [0, 0, 1, 1], [], []>} : vector<8x128xf32>, vector<128x512xf32>, vector<8x512xf32> -> vector<8x512xf32>
    %272 = arith.addf %270, %271 : vector<8x512xf32>
    %273 = vector.extract_strided_slice %272 {offsets = [0, 0], sizes = [8, 128], strides = [1, 1]} : vector<8x512xf32> to vector<8x128xf32>
    %274 = arith.negf %273 : vector<8x128xf32>
    %275 = math.exp %274 : vector<8x128xf32>
    %cst_62 = arith.constant 1.000000e+00 : f32
    %276 = vector.broadcast %cst_62 : f32 to vector<8x128xf32>
    %277 = arith.addf %276, %275 : vector<8x128xf32>
    %278 = arith.divf %276, %277 : vector<8x128xf32>
    %279 = vector.extract_strided_slice %272 {offsets = [0, 128], sizes = [8, 128], strides = [1, 1]} : vector<8x512xf32> to vector<8x128xf32>
    %280 = arith.negf %279 : vector<8x128xf32>
    %281 = math.exp %280 : vector<8x128xf32>
    %cst_63 = arith.constant 1.000000e+00 : f32
    %282 = vector.broadcast %cst_63 : f32 to vector<8x128xf32>
    %283 = arith.addf %282, %281 : vector<8x128xf32>
    %284 = arith.divf %282, %283 : vector<8x128xf32>
    %285 = vector.extract_strided_slice %272 {offsets = [0, 256], sizes = [8, 128], strides = [1, 1]} : vector<8x512xf32> to vector<8x128xf32>
    %286 = math.tanh %285 : vector<8x128xf32>
    %287 = vector.extract_strided_slice %272 {offsets = [0, 384], sizes = [8, 128], strides = [1, 1]} : vector<8x512xf32> to vector<8x128xf32>
    %288 = arith.negf %287 : vector<8x128xf32>
    %289 = math.exp %288 : vector<8x128xf32>
    %cst_64 = arith.constant 1.000000e+00 : f32
    %290 = vector.broadcast %cst_64 : f32 to vector<8x128xf32>
    %291 = arith.addf %290, %289 : vector<8x128xf32>
    %292 = arith.divf %290, %291 : vector<8x128xf32>
    %293 = arith.mulf %284, %258 : vector<8x128xf32>
    %294 = arith.mulf %278, %286 : vector<8x128xf32>
    %295 = arith.addf %293, %294 : vector<8x128xf32>
    %296 = math.tanh %295 : vector<8x128xf32>
    %297 = arith.mulf %292, %296 : vector<8x128xf32>
    %298 = arith.addi %5, %c7_i32 : i32
    %c1_i32_65 = arith.constant 1 : i32
    %299 = arith.addi %298, %c1_i32_65 : i32
    %300 = vector.broadcast %299 : i32 to vector<8x1xi32>
    %301 = arith.cmpi eq, %4, %300 : vector<8x1xi32>
    %302 = vector.shape_cast %301 : vector<8x1xi1> to vector<8x1xi1>
    %303 = vector.broadcast %302 : vector<8x1xi1> to vector<8x128xi1>
    %304 = arith.select %303, %297, %267 : vector<8x128xi1>, vector<8x128xf32>
    %c8_i32_66 = arith.constant 8 : i32
    %c0_67 = arith.constant 0 : index
    %c0_68 = arith.constant 0 : index
    %305 = vector.load %arg8[%c0_67, %c0_68] : memref<8x128xf32, #tpu.memory_space<vmem>>, vector<8x128xf32>
    tpu.vector_store %arg8[%c0_67, %c0_68], %297 {strides = array<i32>} : memref<8x128xf32, #tpu.memory_space<vmem>>, vector<8x128xf32>,
    %c0_69 = arith.constant 0 : index
    %c0_70 = arith.constant 0 : index
    %306 = vector.load %arg9[%c0_69, %c0_70] : memref<8x128xf32, #tpu.memory_space<vmem>>, vector<8x128xf32>
    tpu.vector_store %arg9[%c0_69, %c0_70], %295 {strides = array<i32>} : memref<8x128xf32, #tpu.memory_space<vmem>>, vector<8x128xf32>,
    %c0_71 = arith.constant 0 : index
    %c0_72 = arith.constant 0 : index
    %307 = vector.load %arg10[%c0_71, %c0_72] : memref<8x128xf32, #tpu.memory_space<vmem>>, vector<8x128xf32>
    tpu.vector_store %arg10[%c0_71, %c0_72], %304 {strides = array<i32>} : memref<8x128xf32, #tpu.memory_space<vmem>>, vector<8x128xf32>,
    %c0_i32_73 = arith.constant 0 : i32
    %308 = arith.cmpi eq, %arg1, %c0_i32_73 : i32
    %309 = arith.extui %308 : i1 to i32
    %c0_i32_74 = arith.constant 0 : i32
    %310 = arith.cmpi ne, %309, %c0_i32_74 : i32
    scf.if %310 {
      %c0_75 = arith.constant 0 : index
      %c0_76 = arith.constant 0 : index
      %311 = vector.load %arg5[%c0_75, %c0_76] : memref<128x128xf32, #tpu.memory_space<vmem>>, vector<128x128xf32>
      %cst_77 = arith.constant dense<0.000000e+00> : vector<8x128xf32>
      %312 = tpu.matmul %304, %311, %cst_77 {dimension_numbers = #tpu.dot_dimension_numbers<[1], [0], [0], [1], [0, 0, 1, 1], [], []>} : vector<8x128xf32>, vector<128x128xf32>, vector<8x128xf32> -> vector<8x128xf32>
      %c0_78 = arith.constant 0 : index
      %c0_79 = arith.constant 0 : index
      %313 = vector.load %arg6[%c0_78, %c0_79] : memref<1x128xf32, #tpu.memory_space<vmem>>, vector<1x128xf32>
      %314 = vector.broadcast %313 : vector<1x128xf32> to vector<8x128xf32>
      %315 = arith.addf %312, %314 : vector<8x128xf32>
      %c0_80 = arith.constant 0 : index
      %c0_81 = arith.constant 0 : index
      %316 = vector.load %arg7[%c0_80, %c0_81] : memref<8x128xf32, #tpu.memory_space<vmem>>, vector<8x128xf32>
      tpu.vector_store %arg7[%c0_80, %c0_81], %315 {strides = array<i32>} : memref<8x128xf32, #tpu.memory_space<vmem>>, vector<8x128xf32>,
    } else {
    }
    return
  }
  func.func @transform_0(%arg0: i32, %arg1: i32) -> (i32, i32) {
    %c0_i32 = arith.constant 0 : i32
    %c0_i32_0 = arith.constant 0 : i32
    return %arg0, %c0_i32 : i32, i32
  }
  func.func @transform_1(%arg0: i32, %arg1: i32) -> (i32, i32, i32) {
    %c0_i32 = arith.constant 0 : i32
    %c0_i32_0 = arith.constant 0 : i32
    return %arg1, %arg0, %c0_i32 : i32, i32, i32
  }
  func.func @transform_2(%arg0: i32, %arg1: i32) -> (i32, i32) {
    %c0_i32 = arith.constant 0 : i32
    %c0_i32_0 = arith.constant 0 : i32
    %c0_i32_1 = arith.constant 0 : i32
    return %c0_i32, %c0_i32_0 : i32, i32
  }
  func.func @transform_3(%arg0: i32, %arg1: i32) -> (i32, i32) {
    %c0_i32 = arith.constant 0 : i32
    %c0_i32_0 = arith.constant 0 : i32
    %c0_i32_1 = arith.constant 0 : i32
    return %c0_i32, %c0_i32_0 : i32, i32
  }
  func.func @transform_4(%arg0: i32, %arg1: i32) -> (i32, i32) {
    %c0_i32 = arith.constant 0 : i32
    %c0_i32_0 = arith.constant 0 : i32
    %c0_i32_1 = arith.constant 0 : i32
    return %c0_i32, %c0_i32_0 : i32, i32
  }
  func.func @transform_5(%arg0: i32, %arg1: i32) -> (i32, i32) {
    %c0_i32 = arith.constant 0 : i32
    %c0_i32_0 = arith.constant 0 : i32
    return %arg0, %c0_i32 : i32, i32
  }
}

</mosaic_0001>

<llo_original>
// kernel: sentence_classifier_forward.1
$region0: #{sentence_classifier_forward.1}
  #allocation0 [shape = 'u32[]', space=smem, size = 0x4, offset = 0x4, fixed_abs, tag = 'smem constant byte address 0x4 - core index']
  #allocation1 [shape = 'u32[144,128]{1,0:T(1,128)}', space=vmem, size = 0x12000, scoped, tag = 'internal scratch']
  #allocation2 [shape = 'f32[8,128]{1,0:T(8,128)}', space=vmem, size = 0x1000, scoped, tag = 'scratch operand']
  #allocation3 [shape = 'f32[8,128]{1,0:T(8,128)}', space=vmem, size = 0x1000, scoped, tag = 'scratch operand']
  #allocation4 [shape = 'f32[8,128]{1,0:T(8,128)}', space=vmem, size = 0x1000, scoped, tag = 'scratch operand']
  %s0 = inlined_call_operand.vmem [shape: s32[8,1], index: 0, kind: input, shape index: {}]
  %s1 = inlined_call_operand.vmem [shape: f32[8,8,512], index: 1, kind: input, shape index: {}]
  %s2 = inlined_call_operand.vmem [shape: f32[128,512], index: 2, kind: input, shape index: {}]
  %s3 = inlined_call_operand.vmem [shape: f32[128,128], index: 3, kind: input, shape index: {}]
  %s4 = inlined_call_operand.vmem [shape: f32[1,128], index: 4, kind: input, shape index: {}]
  %s5 = inlined_call_operand.vmem [shape: f32[8,128], index: 5, kind: output, shape index: {}]
  %s6 = sld [smem:[#allocation0]]
  $region38: #{sentence_classifier_forward.1} parent=0
    _
  %s8 = ssub.s32 1, %s6
  %s9 = scalar_select 0, %s8, %s6
  // Predicated region
  $region2: #{sentence_classifier_forward.1} parent=0 // pred_check
    _
  $region3: #{sentence_classifier_forward.1} parent=0 // pred_check_branch
    %11 = sbr.rel (0) target = $region5
  $region4: #{sentence_classifier_forward.1} parent=0 // pred_region
    _
  $region5: #{sentence_classifier_forward.1} parent=0 // pred_fallthru
    _
  // Predicated region
  $region6: #{sentence_classifier_forward.1} parent=0 // pred_check
    _
  $region7: #{sentence_classifier_forward.1} parent=0 // pred_check_branch
    %13 = sbr.rel (0) target = $region9
  $region8: #{sentence_classifier_forward.1} parent=0 // pred_region
    _
  $region9: #{sentence_classifier_forward.1} parent=0 // pred_fallthru
    _
  // Predicated region
  $region10: #{sentence_classifier_forward.1} parent=0 // pred_check
    _
  $region11: #{sentence_classifier_forward.1} parent=0 // pred_check_branch
    %15 = sbr.rel (0) target = $region13
  $region12: #{sentence_classifier_forward.1} parent=0 // pred_region
    _
  $region13: #{sentence_classifier_forward.1} parent=0 // pred_fallthru
    _
  // Predicated region
  $region14: #{sentence_classifier_forward.1} parent=0 // pred_check
    _
  $region15: #{sentence_classifier_forward.1} parent=0 // pred_check_branch
    %17 = sbr.rel (0) target = $region17
  $region16: #{sentence_classifier_forward.1} parent=0 // pred_region
    _
  $region17: #{sentence_classifier_forward.1} parent=0 // pred_fallthru
    _
  // Predicated region
  $region18: #{sentence_classifier_forward.1} parent=0 // pred_check
    _
  $region19: #{sentence_classifier_forward.1} parent=0 // pred_check_branch
    %19 = sbr.rel (0) target = $region21
  $region20: #{sentence_classifier_forward.1} parent=0 // pred_region
    _
  $region21: #{sentence_classifier_forward.1} parent=0 // pred_fallthru
    _
  %p20 = scmp.eq.s32.totalorder 0, 0
  // Predicated region
  $region22: #{sentence_classifier_forward.1} parent=0 // pred_check
    %p21 = pneg %p20
  $region23: #{sentence_classifier_forward.1} parent=0 // pred_check_branch
    %23 = sbr.rel (%p21) target = $region25
  $region24: #{sentence_classifier_forward.1} parent=0 // pred_region
    %24 = vst [vmem:[#allocation2] sm:$0xff] 0.0
    %25 = vst [vmem:[#allocation3] sm:$0xff] 0.0
    %26 = vst [vmem:[#allocation4] sm:$0xff] 0.0
  $region25: #{sentence_classifier_forward.1} parent=0 // pred_fallthru
    _
  %v27 = vld [vmem:[%s2] sm:$0xff]
  %v28 = vld [vmem:[%s2 + $0x8] sm:$0xff]
  %v29 = vld [vmem:[%s2 + $0x10] sm:$0xff]
  %v30 = vld [vmem:[%s2 + $0x18] sm:$0xff]
  %v31 = vld [vmem:[%s2 + $0x20] sm:$0xff]
  %v32 = vld [vmem:[%s2 + $0x28] sm:$0xff]
  %v33 = vld [vmem:[%s2 + $0x30] sm:$0xff]
  %v34 = vld [vmem:[%s2 + $0x38] sm:$0xff]
  %v35 = vld [vmem:[%s2 + $0x40] sm:$0xff]
  %v36 = vld [vmem:[%s2 + $0x48] sm:$0xff]
  %v37 = vld [vmem:[%s2 + $0x50] sm:$0xff]
  %v38 = vld [vmem:[%s2 + $0x58] sm:$0xff]
  %v39 = vld [vmem:[%s2 + $0x60] sm:$0xff]
  %v40 = vld [vmem:[%s2 + $0x68] sm:$0xff]
  %v41 = vld [vmem:[%s2 + $0x70] sm:$0xff]
  %v42 = vld [vmem:[%s2 + $0x78] sm:$0xff]
  %v43 = vld [vmem:[%s2 + $0x80] sm:$0xff]
  %v44 = vld [vmem:[%s2 + $0x88] sm:$0xff]
  %v45 = vld [vmem:[%s2 + $0x90] sm:$0xff]
  %v46 = vld [vmem:[%s2 + $0x98] sm:$0xff]
  %v47 = vld [vmem:[%s2 + $0xa0] sm:$0xff]
  %v48 = vld [vmem:[%s2 + $0xa8] sm:$0xff]
  %v49 = vld [vmem:[%s2 + $0xb0] sm:$0xff]
  %v50 = vld [vmem:[%s2 + $0xb8] sm:$0xff]
  %v51 = vld [vmem:[%s2 + $0xc0] sm:$0xff]
  %v52 = vld [vmem:[%s2 + $0xc8] sm:$0xff]
  %v53 = vld [vmem:[%s2 + $0xd0] sm:$0xff]
  %v54 = vld [vmem:[%s2 + $0xd8] sm:$0xff]
  %v55 = vld [vmem:[%s2 + $0xe0] sm:$0xff]
  %v56 = vld [vmem:[%s2 + $0xe8] sm:$0xff]
  %v57 = vld [vmem:[%s2 + $0xf0] sm:$0xff]
  %v58 = vld [vmem:[%s2 + $0xf8] sm:$0xff]
  %v59 = vld [vmem:[%s2 + $0x100] sm:$0xff]
  %v60 = vld [vmem:[%s2 + $0x108] sm:$0xff]
  %v61 = vld [vmem:[%s2 + $0x110] sm:$0xff]
  %v62 = vld [vmem:[%s2 + $0x118] sm:$0xff]
  %v63 = vld [vmem:[%s2 + $0x120] sm:$0xff]
  %v64 = vld [vmem:[%s2 + $0x128] sm:$0xff]
  %v65 = vld [vmem:[%s2 + $0x130] sm:$0xff]
  %v66 = vld [vmem:[%s2 + $0x138] sm:$0xff]
  %v67 = vld [vmem:[%s2 + $0x140] sm:$0xff]
  %v68 = vld [vmem:[%s2 + $0x148] sm:$0xff]
  %v69 = vld [vmem:[%s2 + $0x150] sm:$0xff]
  %v70 = vld [vmem:[%s2 + $0x158] sm:$0xff]
  %v71 = vld [vmem:[%s2 + $0x160] sm:$0xff]
  %v72 = vld [vmem:[%s2 + $0x168] sm:$0xff]
  %v73 = vld [vmem:[%s2 + $0x170] sm:$0xff]
  %v74 = vld [vmem:[%s2 + $0x178] sm:$0xff]
  %v75 = vld [vmem:[%s2 + $0x180] sm:$0xff]
  %v76 = vld [vmem:[%s2 + $0x188] sm:$0xff]
  %v77 = vld [vmem:[%s2 + $0x190] sm:$0xff]
  %v78 = vld [vmem:[%s2 + $0x198] sm:$0xff]
  %v79 = vld [vmem:[%s2 + $0x1a0] sm:$0xff]
  %v80 = vld [vmem:[%s2 + $0x1a8] sm:$0xff]
  %v81 = vld [vmem:[%s2 + $0x1b0] sm:$0xff]
  %v82 = vld [vmem:[%s2 + $0x1b8] sm:$0xff]
  %v83 = vld [vmem:[%s2 + $0x1c0] sm:$0xff]
  %v84 = vld [vmem:[%s2 + $0x1c8] sm:$0xff]
  %v85 = vld [vmem:[%s2 + $0x1d0] sm:$0xff]
  %v86 = vld [vmem:[%s2 + $0x1d8] sm:$0xff]
  %v87 = vld [vmem:[%s2 + $0x1e0] sm:$0xff]
  %v88 = vld [vmem:[%s2 + $0x1e8] sm:$0xff]
  %v89 = vld [vmem:[%s2 + $0x1f0] sm:$0xff]
  %v90 = vld [vmem:[%s2 + $0x1f8] sm:$0xff]
  %v91 = vld [vmem:[%s0] sm:$0xff]
  %s92 = smul.u32 0, 8
  %v93 = vld [vmem:[#allocation2] sm:$0xff]
  %v94 = vld [vmem:[#allocation3] sm:$0xff]
  %v95 = vld [vmem:[#allocation4] sm:$0xff]
  %v96 = vld [vmem:[%s1] sm:$0xff]
  %v97 = vld [vmem:[%s1 + $0x8] sm:$0xff]
  %v98 = vld [vmem:[%s1 + $0x10] sm:$0xff]
  %v99 = vld [vmem:[%s1 + $0x18] sm:$0xff]
  %100 = vmatprep.subr.mxu0 %v28
  %101 = vmatpush1.msra.mxu0 %v27
  %102 = vmatprep.subr.mxu0 %v32
  %103 = vmatpush1.msra.mxu0 %v31
  %104 = vmatprep.subr.mxu0 %v36
  %105 = vmatpush1.msra.mxu0 %v35
  %106 = vmatprep.subr.mxu0 %v40
  %107 = vmatpush1.msra.mxu0 %v39
  %108 = vmatprep.subr.mxu0 %v44
  %109 = vmatpush1.msra.mxu0 %v43
  %110 = vmatprep.subr.mxu0 %v48
  %111 = vmatpush1.msra.mxu0 %v47
  %112 = vmatprep.subr.mxu0 %v52
  %113 = vmatpush1.msra.mxu0 %v51
  %114 = vmatprep.subr.mxu0 %v56
  %115 = vmatpush1.msra.mxu0 %v55
  %116 = vmatprep.subr.mxu0 %v60
  %117 = vmatpush1.msra.mxu0 %v59
  %118 = vmatprep.subr.mxu0 %v64
  %119 = vmatpush1.msra.mxu0 %v63
  %120 = vmatprep.subr.mxu0 %v68
  %121 = vmatpush1.msra.mxu0 %v67
  %122 = vmatprep.subr.mxu0 %v72
  %123 = vmatpush1.msra.mxu0 %v71
  %124 = vmatprep.subr.mxu0 %v76
  %125 = vmatpush1.msra.mxu0 %v75
  %126 = vmatprep.subr.mxu0 %v80
  %127 = vmatpush1.msra.mxu0 %v79
  %128 = vmatprep.subr.mxu0 %v84
  %129 = vmatpush1.msra.mxu0 %v83
  %130 = vmatprep.subr.mxu0 %v88
  %131 = vmatpush1.msra.mxu0 %v87
  %132 = vmatprep.subr.mxu0 0.0
  %133 = vmatpush1.msra.mxu0 0.0
  %134 = vmatprep.subr.mxu0 0.0
  %135 = vmatpush1.msra.mxu0 0.0
  %136 = vmatprep.subr.mxu0 0.0
  %137 = vmatpush1.msra.mxu0 0.0
  %138 = vmatprep.subr.mxu0 0.0
  %139 = vmatpush1.msra.mxu0 0.0
  %140 = vmatprep.subr.mxu0 0.0
  %141 = vmatpush1.msra.mxu0 0.0
  %142 = vmatprep.subr.mxu0 0.0
  %143 = vmatpush1.msra.mxu0 0.0
  %144 = vmatprep.subr.mxu0 0.0
  %145 = vmatpush1.msra.mxu0 0.0
  %146 = vmatprep.subr.mxu0 0.0
  %147 = vmatpush1.msra.mxu0 0.0
  %148 = vmatprep.subr.mxu0 0.0
  %149 = vmatpush1.msra.mxu0 0.0
  %150 = vmatprep.subr.mxu0 0.0
  %151 = vmatpush1.msra.mxu0 0.0
  %152 = vmatprep.subr.mxu0 0.0
  %153 = vmatpush1.msra.mxu0 0.0
  %154 = vmatprep.subr.mxu0 0.0
  %155 = vmatpush1.msra.mxu0 0.0
  %156 = vmatprep.subr.mxu0 0.0
  %157 = vmatpush1.msra.mxu0 0.0
  %158 = vmatprep.subr.mxu0 0.0
  %159 = vmatpush1.msra.mxu0 0.0
  %160 = vmatprep.subr.mxu0 0.0
  %161 = vmatpush1.msra.mxu0 0.0
  %162 = vmatprep.subr.mxu0 0.0
  %163 = vmatpush1.msra.mxu0 0.0
  %164 = vmatprep.mubr.f32.mxu0 0.0
  %165 = vmatmul.mubr.f32.gmra.mrb[0].mxu0 %v93
  %v166 = vpop.f32.mrb[0].mxu0
  %v167 = vadd.f32 0.0, %v166
  %v168 = vpop.f32.mrb[0].mxu0
  %v169 = vadd.f32 0.0, %v168
  %170 = vdwg.mxu0
  %171 = vmatprep.subr.mxu0 %v30
  %172 = vmatpush1.msra.mxu0 %v29
  %173 = vmatprep.subr.mxu0 %v34
  %174 = vmatpush1.msra.mxu0 %v33
  %175 = vmatprep.subr.mxu0 %v38
  %176 = vmatpush1.msra.mxu0 %v37
  %177 = vmatprep.subr.mxu0 %v42
  %178 = vmatpush1.msra.mxu0 %v41
  %179 = vmatprep.subr.mxu0 %v46
  %180 = vmatpush1.msra.mxu0 %v45
  %181 = vmatprep.subr.mxu0 %v50
  %182 = vmatpush1.msra.mxu0 %v49
  %183 = vmatprep.subr.mxu0 %v54
  %184 = vmatpush1.msra.mxu0 %v53
  %185 = vmatprep.subr.mxu0 %v58
  %186 = vmatpush1.msra.mxu0 %v57
  %187 = vmatprep.subr.mxu0 %v62
  %188 = vmatpush1.msra.mxu0 %v61
  %189 = vmatprep.subr.mxu0 %v66
  %190 = vmatpush1.msra.mxu0 %v65
  %191 = vmatprep.subr.mxu0 %v70
  %192 = vmatpush1.msra.mxu0 %v69
  %193 = vmatprep.subr.mxu0 %v74
  %194 = vmatpush1.msra.mxu0 %v73
  %195 = vmatprep.subr.mxu0 %v78
  %196 = vmatpush1.msra.mxu0 %v77
  %197 = vmatprep.subr.mxu0 %v82
  %198 = vmatpush1.msra.mxu0 %v81
  %199 = vmatprep.subr.mxu0 %v86
  %200 = vmatpush1.msra.mxu0 %v85
  %201 = vmatprep.subr.mxu0 %v90
  %202 = vmatpush1.msra.mxu0 %v89
  %203 = vmatprep.subr.mxu0 0.0
  %204 = vmatpush1.msra.mxu0 0.0
  %205 = vmatprep.subr.mxu0 0.0
  %206 = vmatpush1.msra.mxu0 0.0
  %207 = vmatprep.subr.mxu0 0.0
  %208 = vmatpush1.msra.mxu0 0.0
  %209 = vmatprep.subr.mxu0 0.0
  %210 = vmatpush1.msra.mxu0 0.0
  %211 = vmatprep.subr.mxu0 0.0
  %212 = vmatpush1.msra.mxu0 0.0
  %213 = vmatprep.subr.mxu0 0.0
  %214 = vmatpush1.msra.mxu0 0.0
  %215 = vmatprep.subr.mxu0 0.0
  %216 = vmatpush1.msra.mxu0 0.0
  %217 = vmatprep.subr.mxu0 0.0
  %218 = vmatpush1.msra.mxu0 0.0
  %219 = vmatprep.subr.mxu0 0.0
  %220 = vmatpush1.msra.mxu0 0.0
  %221 = vmatprep.subr.mxu0 0.0
  %222 = vmatpush1.msra.mxu0 0.0
  %223 = vmatprep.subr.mxu0 0.0
  %224 = vmatpush1.msra.mxu0 0.0
  %225 = vmatprep.subr.mxu0 0.0
  %226 = vmatpush1.msra.mxu0 0.0
  %227 = vmatprep.subr.mxu0 0.0
  %228 = vmatpush1.msra.mxu0 0.0
  %229 = vmatprep.subr.mxu0 0.0
  %230 = vmatpush1.msra.mxu0 0.0
  %231 = vmatprep.subr.mxu0 0.0
  %232 = vmatpush1.msra.mxu0 0.0
  %233 = vmatprep.subr.mxu0 0.0
  %234 = vmatpush1.msra.mxu0 0.0
  %235 = vmatprep.mubr.f32.mxu0 0.0
  %236 = vmatmul.mubr.f32.gmra.mrb[0].mxu0 %v93
  %v237 = vpop.f32.mrb[0].mxu0
  %v238 = vadd.f32 0.0, %v237
  %v239 = vpop.f32.mrb[0].mxu0
  %v240 = vadd.f32 0.0, %v239
  %241 = vdwg.mxu0
  %v242 = vadd.f32 %v96, %v167
  %v243 = vadd.f32 %v97, %v169
  %v244 = vadd.f32 %v98, %v238
  %v245 = vadd.f32 %v99, %v240
  %v246 = vxor.u32 %v242, 2147483648
  %v247 = vmul.f32 %v246, 1.442695
  %v248 = vpow.pop %v247
  %v249 = vadd.f32 %v248, 1.0
  %v250 = vrcp.pop %v249
  %v251 = vmul.f32 1.0, %v250
  %v252 = vxor.u32 %v243, 2147483648
  %v253 = vmul.f32 %v252, 1.442695
  %v254 = vpow.pop %v253
  %v255 = vadd.f32 %v254, 1.0
  %v256 = vrcp.pop %v255
  %v257 = vmul.f32 1.0, %v256
  %v258 = vtanh.pop %v244
  %v259 = vxor.u32 %v245, 2147483648
  %v260 = vmul.f32 %v259, 1.442695
  %v261 = vpow.pop %v260
  %v262 = vadd.f32 %v261, 1.0
  %v263 = vrcp.pop %v262
  %v264 = vmul.f32 1.0, %v263
  %v265 = vmul.f32 %v257, %v94
  %v266 = vmul.f32 %v251, %v258
  %v267 = vadd.f32 %v265, %v266
  %v268 = vtanh.pop %v267
  %v269 = vmul.f32 %v264, %v268
  %s270 = sadd.s32 %s92, 1
  %v271 = vstv %s270
  %vm272 = vcmp.eq.s32.totalorder %v91, %v271
  %v273 = vsel %vm272, 1, 0
  %274 = vset.pattern.permute.xlu0 0
  %275 = vperm.xlu0 %274, %v273
  %v276 = vpop.permute.xlu0 %275
  %vm277 = vcmp.eq.s32.totalorder %v276, 1
  %v278 = vsel %vm277, %v269, %v95
  %s279 = scalar_lea.vmem %s1, 32
  %v280 = vld [vmem:[%s279] sm:$0xff]
  %v281 = vld [vmem:[%s279 + $0x8] sm:$0xff]
  %v282 = vld [vmem:[%s279 + $0x10] sm:$0xff]
  %v283 = vld [vmem:[%s279 + $0x18] sm:$0xff]
  %284 = vmatprep.subr.mxu0 %v28
  %285 = vmatpush1.msra.mxu0 %v27
  %286 = vmatprep.subr.mxu0 %v32
  %287 = vmatpush1.msra.mxu0 %v31
  %288 = vmatprep.subr.mxu0 %v36
  %289 = vmatpush1.msra.mxu0 %v35
  %290 = vmatprep.subr.mxu0 %v40
  %291 = vmatpush1.msra.mxu0 %v39
  %292 = vmatprep.subr.mxu0 %v44
  %293 = vmatpush1.msra.mxu0 %v43
  %294 = vmatprep.subr.mxu0 %v48
  %295 = vmatpush1.msra.mxu0 %v47
  %296 = vmatprep.subr.mxu0 %v52
  %297 = vmatpush1.msra.mxu0 %v51
  %298 = vmatprep.subr.mxu0 %v56
  %299 = vmatpush1.msra.mxu0 %v55
  %300 = vmatprep.subr.mxu0 %v60
  %301 = vmatpush1.msra.mxu0 %v59
  %302 = vmatprep.subr.mxu0 %v64
  %303 = vmatpush1.msra.mxu0 %v63
  %304 = vmatprep.subr.mxu0 %v68
  %305 = vmatpush1.msra.mxu0 %v67
  %306 = vmatprep.subr.mxu0 %v72
  %307 = vmatpush1.msra.mxu0 %v71
  %308 = vmatprep.subr.mxu0 %v76
  %309 = vmatpush1.msra.mxu0 %v75
  %310 = vmatprep.subr.mxu0 %v80
  %311 = vmatpush1.msra.mxu0 %v79
  %312 = vmatprep.subr.mxu0 %v84
  %313 = vmatpush1.msra.mxu0 %v83
  %314 = vmatprep.subr.mxu0 %v88
  %315 = vmatpush1.msra.mxu0 %v87
  %316 = vmatprep.subr.mxu0 0.0
  %317 = vmatpush1.msra.mxu0 0.0
  %318 = vmatprep.subr.mxu0 0.0
  %319 = vmatpush1.msra.mxu0 0.0
  %320 = vmatprep.subr.mxu0 0.0
  %321 = vmatpush1.msra.mxu0 0.0
  %322 = vmatprep.subr.mxu0 0.0
  %323 = vmatpush1.msra.mxu0 0.0
  %324 = vmatprep.subr.mxu0 0.0
  %325 = vmatpush1.msra.mxu0 0.0
  %326 = vmatprep.subr.mxu0 0.0
  %327 = vmatpush1.msra.mxu0 0.0
  %328 = vmatprep.subr.mxu0 0.0
  %329 = vmatpush1.msra.mxu0 0.0
  %330 = vmatprep.subr.mxu0 0.0
  %331 = vmatpush1.msra.mxu0 0.0
  %332 = vmatprep.subr.mxu0 0.0
  %333 = vmatpush1.msra.mxu0 0.0
  %334 = vmatprep.subr.mxu0 0.0
  %335 = vmatpush1.msra.mxu0 0.0
  %336 = vmatprep.subr.mxu0 0.0
  %337 = vmatpush1.msra.mxu0 0.0
  %338 = vmatprep.subr.mxu0 0.0
  %339 = vmatpush1.msra.mxu0 0.0
  %340 = vmatprep.subr.mxu0 0.0
  %341 = vmatpush1.msra.mxu0 0.0
  %342 = vmatprep.subr.mxu0 0.0
  %343 = vmatpush1.msra.mxu0 0.0
  %344 = vmatprep.subr.mxu0 0.0
  %345 = vmatpush1.msra.mxu0 0.0
  %346 = vmatprep.subr.mxu0 0.0
  %347 = vmatpush1.msra.mxu0 0.0
  %348 = vmatprep.mubr.f32.mxu0 0.0
  %349 = vmatmul.mubr.f32.gmra.mrb[0].mxu0 %v269
  %v350 = vpop.f32.mrb[0].mxu0
  %v351 = vadd.f32 0.0, %v350
  %v352 = vpop.f32.mrb[0].mxu0
  %v353 = vadd.f32 0.0, %v352
  %354 = vdwg.mxu0
  %355 = vmatprep.subr.mxu0 %v30
  %356 = vmatpush1.msra.mxu0 %v29
  %357 = vmatprep.subr.mxu0 %v34
  %358 = vmatpush1.msra.mxu0 %v33
  %359 = vmatprep.subr.mxu0 %v38
  %360 = vmatpush1.msra.mxu0 %v37
  %361 = vmatprep.subr.mxu0 %v42
  %362 = vmatpush1.msra.mxu0 %v41
  %363 = vmatprep.subr.mxu0 %v46
  %364 = vmatpush1.msra.mxu0 %v45
  %365 = vmatprep.subr.mxu0 %v50
  %366 = vmatpush1.msra.mxu0 %v49
  %367 = vmatprep.subr.mxu0 %v54
  %368 = vmatpush1.msra.mxu0 %v53
  %369 = vmatprep.subr.mxu0 %v58
  %370 = vmatpush1.msra.mxu0 %v57
  %371 = vmatprep.subr.mxu0 %v62
  %372 = vmatpush1.msra.mxu0 %v61
  %373 = vmatprep.subr.mxu0 %v66
  %374 = vmatpush1.msra.mxu0 %v65
  %375 = vmatprep.subr.mxu0 %v70
  %376 = vmatpush1.msra.mxu0 %v69
  %377 = vmatprep.subr.mxu0 %v74
  %378 = vmatpush1.msra.mxu0 %v73
  %379 = vmatprep.subr.mxu0 %v78
  %380 = vmatpush1.msra.mxu0 %v77
  %381 = vmatprep.subr.mxu0 %v82
  %382 = vmatpush1.msra.mxu0 %v81
  %383 = vmatprep.subr.mxu0 %v86
  %384 = vmatpush1.msra.mxu0 %v85
  %385 = vmatprep.subr.mxu0 %v90
  %386 = vmatpush1.msra.mxu0 %v89
  %387 = vmatprep.subr.mxu0 0.0
  %388 = vmatpush1.msra.mxu0 0.0
  %389 = vmatprep.subr.mxu0 0.0
  %390 = vmatpush1.msra.mxu0 0.0
  %391 = vmatprep.subr.mxu0 0.0
  %392 = vmatpush1.msra.mxu0 0.0
  %393 = vmatprep.subr.mxu0 0.0
  %394 = vmatpush1.msra.mxu0 0.0
  %395 = vmatprep.subr.mxu0 0.0
  %396 = vmatpush1.msra.mxu0 0.0
  %397 = vmatprep.subr.mxu0 0.0
  %398 = vmatpush1.msra.mxu0 0.0
  %399 = vmatprep.subr.mxu0 0.0
  %400 = vmatpush1.msra.mxu0 0.0
  %401 = vmatprep.subr.mxu0 0.0
  %402 = vmatpush1.msra.mxu0 0.0
  %403 = vmatprep.subr.mxu0 0.0
  %404 = vmatpush1.msra.mxu0 0.0
  %405 = vmatprep.subr.mxu0 0.0
  %406 = vmatpush1.msra.mxu0 0.0
  %407 = vmatprep.subr.mxu0 0.0
  %408 = vmatpush1.msra.mxu0 0.0
  %409 = vmatprep.subr.mxu0 0.0
  %410 = vmatpush1.msra.mxu0 0.0
  %411 = vmatprep.subr.mxu0 0.0
  %412 = vmatpush1.msra.mxu0 0.0
  %413 = vmatprep.subr.mxu0 0.0
  %414 = vmatpush1.msra.mxu0 0.0
  %415 = vmatprep.subr.mxu0 0.0
  %416 = vmatpush1.msra.mxu0 0.0
  %417 = vmatprep.subr.mxu0 0.0
  %418 = vmatpush1.msra.mxu0 0.0
  %419 = vmatprep.mubr.f32.mxu0 0.0
  %420 = vmatmul.mubr.f32.gmra.mrb[0].mxu0 %v269
  %v421 = vpop.f32.mrb[0].mxu0
  %v422 = vadd.f32 0.0, %v421
  %v423 = vpop.f32.mrb[0].mxu0
  %v424 = vadd.f32 0.0, %v423
  %425 = vdwg.mxu0
  %v426 = vadd.f32 %v280, %v351
  %v427 = vadd.f32 %v281, %v353
  %v428 = vadd.f32 %v282, %v422
  %v429 = vadd.f32 %v283, %v424
  %v430 = vxor.u32 %v426, 2147483648
  %v431 = vmul.f32 %v430, 1.442695
  %v432 = vpow.pop %v431
  %v433 = vadd.f32 %v432, 1.0
  %v434 = vrcp.pop %v433
  %v435 = vmul.f32 1.0, %v434
  %v436 = vxor.u32 %v427, 2147483648
  %v437 = vmul.f32 %v436, 1.442695
  %v438 = vpow.pop %v437
  %v439 = vadd.f32 %v438, 1.0
  %v440 = vrcp.pop %v439
  %v441 = vmul.f32 1.0, %v440
  %v442 = vtanh.pop %v428
  %v443 = vxor.u32 %v429, 2147483648
  %v444 = vmul.f32 %v443, 1.442695
  %v445 = vpow.pop %v444
  %v446 = vadd.f32 %v445, 1.0
  %v447 = vrcp.pop %v446
  %v448 = vmul.f32 1.0, %v447
  %v449 = vmul.f32 %v441, %v267
  %v450 = vmul.f32 %v435, %v442
  %v451 = vadd.f32 %v449, %v450
  %v452 = vtanh.pop %v451
  %v453 = vmul.f32 %v448, %v452
  %s454 = sadd.s32 %s92, 2
  %v455 = vstv %s454
  %vm456 = vcmp.eq.s32.totalorder %v91, %v455
  %v457 = vsel %vm456, 1, 0
  %458 = vset.pattern.permute.xlu0 0
  %459 = vperm.xlu0 %458, %v457
  %v460 = vpop.permute.xlu0 %459
  %vm461 = vcmp.eq.s32.totalorder %v460, 1
  %v462 = vsel %vm461, %v453, %v278
  %s463 = scalar_lea.vmem %s1, 64
  %v464 = vld [vmem:[%s463] sm:$0xff]
  %v465 = vld [vmem:[%s463 + $0x8] sm:$0xff]
  %v466 = vld [vmem:[%s463 + $0x10] sm:$0xff]
  %v467 = vld [vmem:[%s463 + $0x18] sm:$0xff]
  %468 = vmatprep.subr.mxu0 %v28
  %469 = vmatpush1.msra.mxu0 %v27
  %470 = vmatprep.subr.mxu0 %v32
  %471 = vmatpush1.msra.mxu0 %v31
  %472 = vmatprep.subr.mxu0 %v36
  %473 = vmatpush1.msra.mxu0 %v35
  %474 = vmatprep.subr.mxu0 %v40
  %475 = vmatpush1.msra.mxu0 %v39
  %476 = vmatprep.subr.mxu0 %v44
  %477 = vmatpush1.msra.mxu0 %v43
  %478 = vmatprep.subr.mxu0 %v48
  %479 = vmatpush1.msra.mxu0 %v47
  %480 = vmatprep.subr.mxu0 %v52
  %481 = vmatpush1.msra.mxu0 %v51
  %482 = vmatprep.subr.mxu0 %v56
  %483 = vmatpush1.msra.mxu0 %v55
  %484 = vmatprep.subr.mxu0 %v60
  %485 = vmatpush1.msra.mxu0 %v59
  %486 = vmatprep.subr.mxu0 %v64
  %487 = vmatpush1.msra.mxu0 %v63
  %488 = vmatprep.subr.mxu0 %v68
  %489 = vmatpush1.msra.mxu0 %v67
  %490 = vmatprep.subr.mxu0 %v72
  %491 = vmatpush1.msra.mxu0 %v71
  %492 = vmatprep.subr.mxu0 %v76
  %493 = vmatpush1.msra.mxu0 %v75
  %494 = vmatprep.subr.mxu0 %v80
  %495 = vmatpush1.msra.mxu0 %v79
  %496 = vmatprep.subr.mxu0 %v84
  %497 = vmatpush1.msra.mxu0 %v83
  %498 = vmatprep.subr.mxu0 %v88
  %499 = vmatpush1.msra.mxu0 %v87
  %500 = vmatprep.subr.mxu0 0.0
  %501 = vmatpush1.msra.mxu0 0.0
  %502 = vmatprep.subr.mxu0 0.0
  %503 = vmatpush1.msra.mxu0 0.0
  %504 = vmatprep.subr.mxu0 0.0
  %505 = vmatpush1.msra.mxu0 0.0
  %506 = vmatprep.subr.mxu0 0.0
  %507 = vmatpush1.msra.mxu0 0.0
  %508 = vmatprep.subr.mxu0 0.0
  %509 = vmatpush1.msra.mxu0 0.0
  %510 = vmatprep.subr.mxu0 0.0
  %511 = vmatpush1.msra.mxu0 0.0
  %512 = vmatprep.subr.mxu0 0.0
  %513 = vmatpush1.msra.mxu0 0.0
  %514 = vmatprep.subr.mxu0 0.0
  %515 = vmatpush1.msra.mxu0 0.0
  %516 = vmatprep.subr.mxu0 0.0
  %517 = vmatpush1.msra.mxu0 0.0
  %518 = vmatprep.subr.mxu0 0.0
  %519 = vmatpush1.msra.mxu0 0.0
  %520 = vmatprep.subr.mxu0 0.0
  %521 = vmatpush1.msra.mxu0 0.0
  %522 = vmatprep.subr.mxu0 0.0
  %523 = vmatpush1.msra.mxu0 0.0
  %524 = vmatprep.subr.mxu0 0.0
  %525 = vmatpush1.msra.mxu0 0.0
  %526 = vmatprep.subr.mxu0 0.0
  %527 = vmatpush1.msra.mxu0 0.0
  %528 = vmatprep.subr.mxu0 0.0
  %529 = vmatpush1.msra.mxu0 0.0
  %530 = vmatprep.subr.mxu0 0.0
  %531 = vmatpush1.msra.mxu0 0.0
  %532 = vmatprep.mubr.f32.mxu0 0.0
  %533 = vmatmul.mubr.f32.gmra.mrb[0].mxu0 %v453
  %v534 = vpop.f32.mrb[0].mxu0
  %v535 = vadd.f32 0.0, %v534
  %v536 = vpop.f32.mrb[0].mxu0
  %v537 = vadd.f32 0.0, %v536
  %538 = vdwg.mxu0
  %539 = vmatprep.subr.mxu0 %v30
  %540 = vmatpush1.msra.mxu0 %v29
  %541 = vmatprep.subr.mxu0 %v34
  %542 = vmatpush1.msra.mxu0 %v33
  %543 = vmatprep.subr.mxu0 %v38
  %544 = vmatpush1.msra.mxu0 %v37
  %545 = vmatprep.subr.mxu0 %v42
  %546 = vmatpush1.msra.mxu0 %v41
  %547 = vmatprep.subr.mxu0 %v46
  %548 = vmatpush1.msra.mxu0 %v45
  %549 = vmatprep.subr.mxu0 %v50
  %550 = vmatpush1.msra.mxu0 %v49
  %551 = vmatprep.subr.mxu0 %v54
  %552 = vmatpush1.msra.mxu0 %v53
  %553 = vmatprep.subr.mxu0 %v58
  %554 = vmatpush1.msra.mxu0 %v57
  %555 = vmatprep.subr.mxu0 %v62
  %556 = vmatpush1.msra.mxu0 %v61
  %557 = vmatprep.subr.mxu0 %v66
  %558 = vmatpush1.msra.mxu0 %v65
  %559 = vmatprep.subr.mxu0 %v70
  %560 = vmatpush1.msra.mxu0 %v69
  %561 = vmatprep.subr.mxu0 %v74
  %562 = vmatpush1.msra.mxu0 %v73
  %563 = vmatprep.subr.mxu0 %v78
  %564 = vmatpush1.msra.mxu0 %v77
  %565 = vmatprep.subr.mxu0 %v82
  %566 = vmatpush1.msra.mxu0 %v81
  %567 = vmatprep.subr.mxu0 %v86
  %568 = vmatpush1.msra.mxu0 %v85
  %569 = vmatprep.subr.mxu0 %v90
  %570 = vmatpush1.msra.mxu0 %v89
  %571 = vmatprep.subr.mxu0 0.0
  %572 = vmatpush1.msra.mxu0 0.0
  %573 = vmatprep.subr.mxu0 0.0
  %574 = vmatpush1.msra.mxu0 0.0
  %575 = vmatprep.subr.mxu0 0.0
  %576 = vmatpush1.msra.mxu0 0.0
  %577 = vmatprep.subr.mxu0 0.0
  %578 = vmatpush1.msra.mxu0 0.0
  %579 = vmatprep.subr.mxu0 0.0
  %580 = vmatpush1.msra.mxu0 0.0
  %581 = vmatprep.subr.mxu0 0.0
  %582 = vmatpush1.msra.mxu0 0.0
  %583 = vmatprep.subr.mxu0 0.0
  %584 = vmatpush1.msra.mxu0 0.0
  %585 = vmatprep.subr.mxu0 0.0
  %586 = vmatpush1.msra.mxu0 0.0
  %587 = vmatprep.subr.mxu0 0.0
  %588 = vmatpush1.msra.mxu0 0.0
  %589 = vmatprep.subr.mxu0 0.0
  %590 = vmatpush1.msra.mxu0 0.0
  %591 = vmatprep.subr.mxu0 0.0
  %592 = vmatpush1.msra.mxu0 0.0
  %593 = vmatprep.subr.mxu0 0.0
  %594 = vmatpush1.msra.mxu0 0.0
  %595 = vmatprep.subr.mxu0 0.0
  %596 = vmatpush1.msra.mxu0 0.0
  %597 = vmatprep.subr.mxu0 0.0
  %598 = vmatpush1.msra.mxu0 0.0
  %599 = vmatprep.subr.mxu0 0.0
  %600 = vmatpush1.msra.mxu0 0.0
  %601 = vmatprep.subr.mxu0 0.0
  %602 = vmatpush1.msra.mxu0 0.0
  %603 = vmatprep.mubr.f32.mxu0 0.0
  %604 = vmatmul.mubr.f32.gmra.mrb[0].mxu0 %v453
  %v605 = vpop.f32.mrb[0].mxu0
  %v606 = vadd.f32 0.0, %v605
  %v607 = vpop.f32.mrb[0].mxu0
  %v608 = vadd.f32 0.0, %v607
  %609 = vdwg.mxu0
  %v610 = vadd.f32 %v464, %v535
  %v611 = vadd.f32 %v465, %v537
  %v612 = vadd.f32 %v466, %v606
  %v613 = vadd.f32 %v467, %v608
  %v614 = vxor.u32 %v610, 2147483648
  %v615 = vmul.f32 %v614, 1.442695
  %v616 = vpow.pop %v615
  %v617 = vadd.f32 %v616, 1.0
  %v618 = vrcp.pop %v617
  %v619 = vmul.f32 1.0, %v618
  %v620 = vxor.u32 %v611, 2147483648
  %v621 = vmul.f32 %v620, 1.442695
  %v622 = vpow.pop %v621
  %v623 = vadd.f32 %v622, 1.0
  %v624 = vrcp.pop %v623
  %v625 = vmul.f32 1.0, %v624
  %v626 = vtanh.pop %v612
  %v627 = vxor.u32 %v613, 2147483648
  %v628 = vmul.f32 %v627, 1.442695
  %v629 = vpow.pop %v628
  %v630 = vadd.f32 %v629, 1.0
  %v631 = vrcp.pop %v630
  %v632 = vmul.f32 1.0, %v631
  %v633 = vmul.f32 %v625, %v451
  %v634 = vmul.f32 %v619, %v626
  %v635 = vadd.f32 %v633, %v634
  %v636 = vtanh.pop %v635
  %v637 = vmul.f32 %v632, %v636
  %s638 = sadd.s32 %s92, 3
  %v639 = vstv %s638
  %vm640 = vcmp.eq.s32.totalorder %v91, %v639
  %v641 = vsel %vm640, 1, 0
  %642 = vset.pattern.permute.xlu0 0
  %643 = vperm.xlu0 %642, %v641
  %v644 = vpop.permute.xlu0 %643
  %vm645 = vcmp.eq.s32.totalorder %v644, 1
  %v646 = vsel %vm645, %v637, %v462
  %s647 = scalar_lea.vmem %s1, 96
  %v648 = vld [vmem:[%s647] sm:$0xff]
  %v649 = vld [vmem:[%s647 + $0x8] sm:$0xff]
  %v650 = vld [vmem:[%s647 + $0x10] sm:$0xff]
  %v651 = vld [vmem:[%s647 + $0x18] sm:$0xff]
  %652 = vmatprep.subr.mxu0 %v28
  %653 = vmatpush1.msra.mxu0 %v27
  %654 = vmatprep.subr.mxu0 %v32
  %655 = vmatpush1.msra.mxu0 %v31
  %656 = vmatprep.subr.mxu0 %v36
  %657 = vmatpush1.msra.mxu0 %v35
  %658 = vmatprep.subr.mxu0 %v40
  %659 = vmatpush1.msra.mxu0 %v39
  %660 = vmatprep.subr.mxu0 %v44
  %661 = vmatpush1.msra.mxu0 %v43
  %662 = vmatprep.subr.mxu0 %v48
  %663 = vmatpush1.msra.mxu0 %v47
  %664 = vmatprep.subr.mxu0 %v52
  %665 = vmatpush1.msra.mxu0 %v51
  %666 = vmatprep.subr.mxu0 %v56
  %667 = vmatpush1.msra.mxu0 %v55
  %668 = vmatprep.subr.mxu0 %v60
  %669 = vmatpush1.msra.mxu0 %v59
  %670 = vmatprep.subr.mxu0 %v64
  %671 = vmatpush1.msra.mxu0 %v63
  %672 = vmatprep.subr.mxu0 %v68
  %673 = vmatpush1.msra.mxu0 %v67
  %674 = vmatprep.subr.mxu0 %v72
  %675 = vmatpush1.msra.mxu0 %v71
  %676 = vmatprep.subr.mxu0 %v76
  %677 = vmatpush1.msra.mxu0 %v75
  %678 = vmatprep.subr.mxu0 %v80
  %679 = vmatpush1.msra.mxu0 %v79
  %680 = vmatprep.subr.mxu0 %v84
  %681 = vmatpush1.msra.mxu0 %v83
  %682 = vmatprep.subr.mxu0 %v88
  %683 = vmatpush1.msra.mxu0 %v87
  %684 = vmatprep.subr.mxu0 0.0
  %685 = vmatpush1.msra.mxu0 0.0
  %686 = vmatprep.subr.mxu0 0.0
  %687 = vmatpush1.msra.mxu0 0.0
  %688 = vmatprep.subr.mxu0 0.0
  %689 = vmatpush1.msra.mxu0 0.0
  %690 = vmatprep.subr.mxu0 0.0
  %691 = vmatpush1.msra.mxu0 0.0
  %692 = vmatprep.subr.mxu0 0.0
  %693 = vmatpush1.msra.mxu0 0.0
  %694 = vmatprep.subr.mxu0 0.0
  %695 = vmatpush1.msra.mxu0 0.0
  %696 = vmatprep.subr.mxu0 0.0
  %697 = vmatpush1.msra.mxu0 0.0
  %698 = vmatprep.subr.mxu0 0.0
  %699 = vmatpush1.msra.mxu0 0.0
  %700 = vmatprep.subr.mxu0 0.0
  %701 = vmatpush1.msra.mxu0 0.0
  %702 = vmatprep.subr.mxu0 0.0
  %703 = vmatpush1.msra.mxu0 0.0
  %704 = vmatprep.subr.mxu0 0.0
  %705 = vmatpush1.msra.mxu0 0.0
  %706 = vmatprep.subr.mxu0 0.0
  %707 = vmatpush1.msra.mxu0 0.0
  %708 = vmatprep.subr.mxu0 0.0
  %709 = vmatpush1.msra.mxu0 0.0
  %710 = vmatprep.subr.mxu0 0.0
  %711 = vmatpush1.msra.mxu0 0.0
  %712 = vmatprep.subr.mxu0 0.0
  %713 = vmatpush1.msra.mxu0 0.0
  %714 = vmatprep.subr.mxu0 0.0
  %715 = vmatpush1.msra.mxu0 0.0
  %716 = vmatprep.mubr.f32.mxu0 0.0
  %717 = vmatmul.mubr.f32.gmra.mrb[0].mxu0 %v637
  %v718 = vpop.f32.mrb[0].mxu0
  %v719 = vadd.f32 0.0, %v718
  %v720 = vpop.f32.mrb[0].mxu0
  %v721 = vadd.f32 0.0, %v720
  %722 = vdwg.mxu0
  %723 = vmatprep.subr.mxu0 %v30
  %724 = vmatpush1.msra.mxu0 %v29
  %725 = vmatprep.subr.mxu0 %v34
  %726 = vmatpush1.msra.mxu0 %v33
  %727 = vmatprep.subr.mxu0 %v38
  %728 = vmatpush1.msra.mxu0 %v37
  %729 = vmatprep.subr.mxu0 %v42
  %730 = vmatpush1.msra.mxu0 %v41
  %731 = vmatprep.subr.mxu0 %v46
  %732 = vmatpush1.msra.mxu0 %v45
  %733 = vmatprep.subr.mxu0 %v50
  %734 = vmatpush1.msra.mxu0 %v49
  %735 = vmatprep.subr.mxu0 %v54
  %736 = vmatpush1.msra.mxu0 %v53
  %737 = vmatprep.subr.mxu0 %v58
  %738 = vmatpush1.msra.mxu0 %v57
  %739 = vmatprep.subr.mxu0 %v62
  %740 = vmatpush1.msra.mxu0 %v61
  %741 = vmatprep.subr.mxu0 %v66
  %742 = vmatpush1.msra.mxu0 %v65
  %743 = vmatprep.subr.mxu0 %v70
  %744 = vmatpush1.msra.mxu0 %v69
  %745 = vmatprep.subr.mxu0 %v74
  %746 = vmatpush1.msra.mxu0 %v73
  %747 = vmatprep.subr.mxu0 %v78
  %748 = vmatpush1.msra.mxu0 %v77
  %749 = vmatprep.subr.mxu0 %v82
  %750 = vmatpush1.msra.mxu0 %v81
  %751 = vmatprep.subr.mxu0 %v86
  %752 = vmatpush1.msra.mxu0 %v85
  %753 = vmatprep.subr.mxu0 %v90
  %754 = vmatpush1.msra.mxu0 %v89
  %755 = vmatprep.subr.mxu0 0.0
  %756 = vmatpush1.msra.mxu0 0.0
  %757 = vmatprep.subr.mxu0 0.0
  %758 = vmatpush1.msra.mxu0 0.0
  %759 = vmatprep.subr.mxu0 0.0
  %760 = vmatpush1.msra.mxu0 0.0
  %761 = vmatprep.subr.mxu0 0.0
  %762 = vmatpush1.msra.mxu0 0.0
  %763 = vmatprep.subr.mxu0 0.0
  %764 = vmatpush1.msra.mxu0 0.0
  %765 = vmatprep.subr.mxu0 0.0
  %766 = vmatpush1.msra.mxu0 0.0
  %767 = vmatprep.subr.mxu0 0.0
  %768 = vmatpush1.msra.mxu0 0.0
  %769 = vmatprep.subr.mxu0 0.0
  %770 = vmatpush1.msra.mxu0 0.0
  %771 = vmatprep.subr.mxu0 0.0
  %772 = vmatpush1.msra.mxu0 0.0
  %773 = vmatprep.subr.mxu0 0.0
  %774 = vmatpush1.msra.mxu0 0.0
  %775 = vmatprep.subr.mxu0 0.0
  %776 = vmatpush1.msra.mxu0 0.0
  %777 = vmatprep.subr.mxu0 0.0
  %778 = vmatpush1.msra.mxu0 0.0
  %779 = vmatprep.subr.mxu0 0.0
  %780 = vmatpush1.msra.mxu0 0.0
  %781 = vmatprep.subr.mxu0 0.0
  %782 = vmatpush1.msra.mxu0 0.0
  %783 = vmatprep.subr.mxu0 0.0
  %784 = vmatpush1.msra.mxu0 0.0
  %785 = vmatprep.subr.mxu0 0.0
  %786 = vmatpush1.msra.mxu0 0.0
  %787 = vmatprep.mubr.f32.mxu0 0.0
  %788 = vmatmul.mubr.f32.gmra.mrb[0].mxu0 %v637
  %v789 = vpop.f32.mrb[0].mxu0
  %v790 = vadd.f32 0.0, %v789
  %v791 = vpop.f32.mrb[0].mxu0
  %v792 = vadd.f32 0.0, %v791
  %793 = vdwg.mxu0
  %v794 = vadd.f32 %v648, %v719
  %v795 = vadd.f32 %v649, %v721
  %v796 = vadd.f32 %v650, %v790
  %v797 = vadd.f32 %v651, %v792
  %v798 = vxor.u32 %v794, 2147483648
  %v799 = vmul.f32 %v798, 1.442695
  %v800 = vpow.pop %v799
  %v801 = vadd.f32 %v800, 1.0
  %v802 = vrcp.pop %v801
  %v803 = vmul.f32 1.0, %v802
  %v804 = vxor.u32 %v795, 2147483648
  %v805 = vmul.f32 %v804, 1.442695
  %v806 = vpow.pop %v805
  %v807 = vadd.f32 %v806, 1.0
  %v808 = vrcp.pop %v807
  %v809 = vmul.f32 1.0, %v808
  %v810 = vtanh.pop %v796
  %v811 = vxor.u32 %v797, 2147483648
  %v812 = vmul.f32 %v811, 1.442695
  %v813 = vpow.pop %v812
  %v814 = vadd.f32 %v813, 1.0
  %v815 = vrcp.pop %v814
  %v816 = vmul.f32 1.0, %v815
  %v817 = vmul.f32 %v809, %v635
  %v818 = vmul.f32 %v803, %v810
  %v819 = vadd.f32 %v817, %v818
  %v820 = vtanh.pop %v819
  %v821 = vmul.f32 %v816, %v820
  %s822 = sadd.s32 %s92, 4
  %v823 = vstv %s822
  %vm824 = vcmp.eq.s32.totalorder %v91, %v823
  %v825 = vsel %vm824, 1, 0
  %826 = vset.pattern.permute.xlu0 0
  %827 = vperm.xlu0 %826, %v825
  %v828 = vpop.permute.xlu0 %827
  %vm829 = vcmp.eq.s32.totalorder %v828, 1
  %v830 = vsel %vm829, %v821, %v646
  %s831 = scalar_lea.vmem %s1, 128
  %v832 = vld [vmem:[%s831] sm:$0xff]
  %v833 = vld [vmem:[%s831 + $0x8] sm:$0xff]
  %v834 = vld [vmem:[%s831 + $0x10] sm:$0xff]
  %v835 = vld [vmem:[%s831 + $0x18] sm:$0xff]
  %836 = vmatprep.subr.mxu0 %v28
  %837 = vmatpush1.msra.mxu0 %v27
  %838 = vmatprep.subr.mxu0 %v32
  %839 = vmatpush1.msra.mxu0 %v31
  %840 = vmatprep.subr.mxu0 %v36
  %841 = vmatpush1.msra.mxu0 %v35
  %842 = vmatprep.subr.mxu0 %v40
  %843 = vmatpush1.msra.mxu0 %v39
  %844 = vmatprep.subr.mxu0 %v44
  %845 = vmatpush1.msra.mxu0 %v43
  %846 = vmatprep.subr.mxu0 %v48
  %847 = vmatpush1.msra.mxu0 %v47
  %848 = vmatprep.subr.mxu0 %v52
  %849 = vmatpush1.msra.mxu0 %v51
  %850 = vmatprep.subr.mxu0 %v56
  %851 = vmatpush1.msra.mxu0 %v55
  %852 = vmatprep.subr.mxu0 %v60
  %853 = vmatpush1.msra.mxu0 %v59
  %854 = vmatprep.subr.mxu0 %v64
  %855 = vmatpush1.msra.mxu0 %v63
  %856 = vmatprep.subr.mxu0 %v68
  %857 = vmatpush1.msra.mxu0 %v67
  %858 = vmatprep.subr.mxu0 %v72
  %859 = vmatpush1.msra.mxu0 %v71
  %860 = vmatprep.subr.mxu0 %v76
  %861 = vmatpush1.msra.mxu0 %v75
  %862 = vmatprep.subr.mxu0 %v80
  %863 = vmatpush1.msra.mxu0 %v79
  %864 = vmatprep.subr.mxu0 %v84
  %865 = vmatpush1.msra.mxu0 %v83
  %866 = vmatprep.subr.mxu0 %v88
  %867 = vmatpush1.msra.mxu0 %v87
  %868 = vmatprep.subr.mxu0 0.0
  %869 = vmatpush1.msra.mxu0 0.0
  %870 = vmatprep.subr.mxu0 0.0
  %871 = vmatpush1.msra.mxu0 0.0
  %872 = vmatprep.subr.mxu0 0.0
  %873 = vmatpush1.msra.mxu0 0.0
  %874 = vmatprep.subr.mxu0 0.0
  %875 = vmatpush1.msra.mxu0 0.0
  %876 = vmatprep.subr.mxu0 0.0
  %877 = vmatpush1.msra.mxu0 0.0
  %878 = vmatprep.subr.mxu0 0.0
  %879 = vmatpush1.msra.mxu0 0.0
  %880 = vmatprep.subr.mxu0 0.0
  %881 = vmatpush1.msra.mxu0 0.0
  %882 = vmatprep.subr.mxu0 0.0
  %883 = vmatpush1.msra.mxu0 0.0
  %884 = vmatprep.subr.mxu0 0.0
  %885 = vmatpush1.msra.mxu0 0.0
  %886 = vmatprep.subr.mxu0 0.0
  %887 = vmatpush1.msra.mxu0 0.0
  %888 = vmatprep.subr.mxu0 0.0
  %889 = vmatpush1.msra.mxu0 0.0
  %890 = vmatprep.subr.mxu0 0.0
  %891 = vmatpush1.msra.mxu0 0.0
  %892 = vmatprep.subr.mxu0 0.0
  %893 = vmatpush1.msra.mxu0 0.0
  %894 = vmatprep.subr.mxu0 0.0
  %895 = vmatpush1.msra.mxu0 0.0
  %896 = vmatprep.subr.mxu0 0.0
  %897 = vmatpush1.msra.mxu0 0.0
  %898 = vmatprep.subr.mxu0 0.0
  %899 = vmatpush1.msra.mxu0 0.0
  %900 = vmatprep.mubr.f32.mxu0 0.0
  %901 = vmatmul.mubr.f32.gmra.mrb[0].mxu0 %v821
  %v902 = vpop.f32.mrb[0].mxu0
  %v903 = vadd.f32 0.0, %v902
  %v904 = vpop.f32.mrb[0].mxu0
  %v905 = vadd.f32 0.0, %v904
  %906 = vdwg.mxu0
  %907 = vmatprep.subr.mxu0 %v30
  %908 = vmatpush1.msra.mxu0 %v29
  %909 = vmatprep.subr.mxu0 %v34
  %910 = vmatpush1.msra.mxu0 %v33
  %911 = vmatprep.subr.mxu0 %v38
  %912 = vmatpush1.msra.mxu0 %v37
  %913 = vmatprep.subr.mxu0 %v42
  %914 = vmatpush1.msra.mxu0 %v41
  %915 = vmatprep.subr.mxu0 %v46
  %916 = vmatpush1.msra.mxu0 %v45
  %917 = vmatprep.subr.mxu0 %v50
  %918 = vmatpush1.msra.mxu0 %v49
  %919 = vmatprep.subr.mxu0 %v54
  %920 = vmatpush1.msra.mxu0 %v53
  %921 = vmatprep.subr.mxu0 %v58
  %922 = vmatpush1.msra.mxu0 %v57
  %923 = vmatprep.subr.mxu0 %v62
  %924 = vmatpush1.msra.mxu0 %v61
  %925 = vmatprep.subr.mxu0 %v66
  %926 = vmatpush1.msra.mxu0 %v65
  %927 = vmatprep.subr.mxu0 %v70
  %928 = vmatpush1.msra.mxu0 %v69
  %929 = vmatprep.subr.mxu0 %v74
  %930 = vmatpush1.msra.mxu0 %v73
  %931 = vmatprep.subr.mxu0 %v78
  %932 = vmatpush1.msra.mxu0 %v77
  %933 = vmatprep.subr.mxu0 %v82
  %934 = vmatpush1.msra.mxu0 %v81
  %935 = vmatprep.subr.mxu0 %v86
  %936 = vmatpush1.msra.mxu0 %v85
  %937 = vmatprep.subr.mxu0 %v90
  %938 = vmatpush1.msra.mxu0 %v89
  %939 = vmatprep.subr.mxu0 0.0
  %940 = vmatpush1.msra.mxu0 0.0
  %941 = vmatprep.subr.mxu0 0.0
  %942 = vmatpush1.msra.mxu0 0.0
  %943 = vmatprep.subr.mxu0 0.0
  %944 = vmatpush1.msra.mxu0 0.0
  %945 = vmatprep.subr.mxu0 0.0
  %946 = vmatpush1.msra.mxu0 0.0
  %947 = vmatprep.subr.mxu0 0.0
  %948 = vmatpush1.msra.mxu0 0.0
  %949 = vmatprep.subr.mxu0 0.0
  %950 = vmatpush1.msra.mxu0 0.0
  %951 = vmatprep.subr.mxu0 0.0
  %952 = vmatpush1.msra.mxu0 0.0
  %953 = vmatprep.subr.mxu0 0.0
  %954 = vmatpush1.msra.mxu0 0.0
  %955 = vmatprep.subr.mxu0 0.0
  %956 = vmatpush1.msra.mxu0 0.0
  %957 = vmatprep.subr.mxu0 0.0
  %958 = vmatpush1.msra.mxu0 0.0
  %959 = vmatprep.subr.mxu0 0.0
  %960 = vmatpush1.msra.mxu0 0.0
  %961 = vmatprep.subr.mxu0 0.0
  %962 = vmatpush1.msra.mxu0 0.0
  %963 = vmatprep.subr.mxu0 0.0
  %964 = vmatpush1.msra.mxu0 0.0
  %965 = vmatprep.subr.mxu0 0.0
  %966 = vmatpush1.msra.mxu0 0.0
  %967 = vmatprep.subr.mxu0 0.0
  %968 = vmatpush1.msra.mxu0 0.0
  %969 = vmatprep.subr.mxu0 0.0
  %970 = vmatpush1.msra.mxu0 0.0
  %971 = vmatprep.mubr.f32.mxu0 0.0
  %972 = vmatmul.mubr.f32.gmra.mrb[0].mxu0 %v821
  %v973 = vpop.f32.mrb[0].mxu0
  %v974 = vadd.f32 0.0, %v973
  %v975 = vpop.f32.mrb[0].mxu0
  %v976 = vadd.f32 0.0, %v975
  %977 = vdwg.mxu0
  %v978 = vadd.f32 %v832, %v903
  %v979 = vadd.f32 %v833, %v905
  %v980 = vadd.f32 %v834, %v974
  %v981 = vadd.f32 %v835, %v976
  %v982 = vxor.u32 %v978, 2147483648
  %v983 = vmul.f32 %v982, 1.442695
  %v984 = vpow.pop %v983
  %v985 = vadd.f32 %v984, 1.0
  %v986 = vrcp.pop %v985
  %v987 = vmul.f32 1.0, %v986
  %v988 = vxor.u32 %v979, 2147483648
  %v989 = vmul.f32 %v988, 1.442695
  %v990 = vpow.pop %v989
  %v991 = vadd.f32 %v990, 1.0
  %v992 = vrcp.pop %v991
  %v993 = vmul.f32 1.0, %v992
  %v994 = vtanh.pop %v980
  %v995 = vxor.u32 %v981, 2147483648
  %v996 = vmul.f32 %v995, 1.442695
  %v997 = vpow.pop %v996
  %v998 = vadd.f32 %v997, 1.0
  %v999 = vrcp.pop %v998
  %v1000 = vmul.f32 1.0, %v999
  %v1001 = vmul.f32 %v993, %v819
  %v1002 = vmul.f32 %v987, %v994
  %v1003 = vadd.f32 %v1001, %v1002
  %v1004 = vtanh.pop %v1003
  %v1005 = vmul.f32 %v1000, %v1004
  %s1006 = sadd.s32 %s92, 5
  %v1007 = vstv %s1006
  %vm1008 = vcmp.eq.s32.totalorder %v91, %v1007
  %v1009 = vsel %vm1008, 1, 0
  %1010 = vset.pattern.permute.xlu0 0
  %1011 = vperm.xlu0 %1010, %v1009
  %v1012 = vpop.permute.xlu0 %1011
  %vm1013 = vcmp.eq.s32.totalorder %v1012, 1
  %v1014 = vsel %vm1013, %v1005, %v830
  %s1015 = scalar_lea.vmem %s1, 160
  %v1016 = vld [vmem:[%s1015] sm:$0xff]
  %v1017 = vld [vmem:[%s1015 + $0x8] sm:$0xff]
  %v1018 = vld [vmem:[%s1015 + $0x10] sm:$0xff]
  %v1019 = vld [vmem:[%s1015 + $0x18] sm:$0xff]
  %1020 = vmatprep.subr.mxu0 %v28
  %1021 = vmatpush1.msra.mxu0 %v27
  %1022 = vmatprep.subr.mxu0 %v32
  %1023 = vmatpush1.msra.mxu0 %v31
  %1024 = vmatprep.subr.mxu0 %v36
  %1025 = vmatpush1.msra.mxu0 %v35
  %1026 = vmatprep.subr.mxu0 %v40
  %1027 = vmatpush1.msra.mxu0 %v39
  %1028 = vmatprep.subr.mxu0 %v44
  %1029 = vmatpush1.msra.mxu0 %v43
  %1030 = vmatprep.subr.mxu0 %v48
  %1031 = vmatpush1.msra.mxu0 %v47
  %1032 = vmatprep.subr.mxu0 %v52
  %1033 = vmatpush1.msra.mxu0 %v51
  %1034 = vmatprep.subr.mxu0 %v56
  %1035 = vmatpush1.msra.mxu0 %v55
  %1036 = vmatprep.subr.mxu0 %v60
  %1037 = vmatpush1.msra.mxu0 %v59
  %1038 = vmatprep.subr.mxu0 %v64
  %1039 = vmatpush1.msra.mxu0 %v63
  %1040 = vmatprep.subr.mxu0 %v68
  %1041 = vmatpush1.msra.mxu0 %v67
  %1042 = vmatprep.subr.mxu0 %v72
  %1043 = vmatpush1.msra.mxu0 %v71
  %1044 = vmatprep.subr.mxu0 %v76
  %1045 = vmatpush1.msra.mxu0 %v75
  %1046 = vmatprep.subr.mxu0 %v80
  %1047 = vmatpush1.msra.mxu0 %v79
  %1048 = vmatprep.subr.mxu0 %v84
  %1049 = vmatpush1.msra.mxu0 %v83
  %1050 = vmatprep.subr.mxu0 %v88
  %1051 = vmatpush1.msra.mxu0 %v87
  %1052 = vmatprep.subr.mxu0 0.0
  %1053 = vmatpush1.msra.mxu0 0.0
  %1054 = vmatprep.subr.mxu0 0.0
  %1055 = vmatpush1.msra.mxu0 0.0
  %1056 = vmatprep.subr.mxu0 0.0
  %1057 = vmatpush1.msra.mxu0 0.0
  %1058 = vmatprep.subr.mxu0 0.0
  %1059 = vmatpush1.msra.mxu0 0.0
  %1060 = vmatprep.subr.mxu0 0.0
  %1061 = vmatpush1.msra.mxu0 0.0
  %1062 = vmatprep.subr.mxu0 0.0
  %1063 = vmatpush1.msra.mxu0 0.0
  %1064 = vmatprep.subr.mxu0 0.0
  %1065 = vmatpush1.msra.mxu0 0.0
  %1066 = vmatprep.subr.mxu0 0.0
  %1067 = vmatpush1.msra.mxu0 0.0
  %1068 = vmatprep.subr.mxu0 0.0
  %1069 = vmatpush1.msra.mxu0 0.0
  %1070 = vmatprep.subr.mxu0 0.0
  %1071 = vmatpush1.msra.mxu0 0.0
  %1072 = vmatprep.subr.mxu0 0.0
  %1073 = vmatpush1.msra.mxu0 0.0
  %1074 = vmatprep.subr.mxu0 0.0
  %1075 = vmatpush1.msra.mxu0 0.0
  %1076 = vmatprep.subr.mxu0 0.0
  %1077 = vmatpush1.msra.mxu0 0.0
  %1078 = vmatprep.subr.mxu0 0.0
  %1079 = vmatpush1.msra.mxu0 0.0
  %1080 = vmatprep.subr.mxu0 0.0
  %1081 = vmatpush1.msra.mxu0 0.0
  %1082 = vmatprep.subr.mxu0 0.0
  %1083 = vmatpush1.msra.mxu0 0.0
  %1084 = vmatprep.mubr.f32.mxu0 0.0
  %1085 = vmatmul.mubr.f32.gmra.mrb[0].mxu0 %v1005
  %v1086 = vpop.f32.mrb[0].mxu0
  %v1087 = vadd.f32 0.0, %v1086
  %v1088 = vpop.f32.mrb[0].mxu0
  %v1089 = vadd.f32 0.0, %v1088
  %1090 = vdwg.mxu0
  %1091 = vmatprep.subr.mxu0 %v30
  %1092 = vmatpush1.msra.mxu0 %v29
  %1093 = vmatprep.subr.mxu0 %v34
  %1094 = vmatpush1.msra.mxu0 %v33
  %1095 = vmatprep.subr.mxu0 %v38
  %1096 = vmatpush1.msra.mxu0 %v37
  %1097 = vmatprep.subr.mxu0 %v42
  %1098 = vmatpush1.msra.mxu0 %v41
  %1099 = vmatprep.subr.mxu0 %v46
  %1100 = vmatpush1.msra.mxu0 %v45
  %1101 = vmatprep.subr.mxu0 %v50
  %1102 = vmatpush1.msra.mxu0 %v49
  %1103 = vmatprep.subr.mxu0 %v54
  %1104 = vmatpush1.msra.mxu0 %v53
  %1105 = vmatprep.subr.mxu0 %v58
  %1106 = vmatpush1.msra.mxu0 %v57
  %1107 = vmatprep.subr.mxu0 %v62
  %1108 = vmatpush1.msra.mxu0 %v61
  %1109 = vmatprep.subr.mxu0 %v66
  %1110 = vmatpush1.msra.mxu0 %v65
  %1111 = vmatprep.subr.mxu0 %v70
  %1112 = vmatpush1.msra.mxu0 %v69
  %1113 = vmatprep.subr.mxu0 %v74
  %1114 = vmatpush1.msra.mxu0 %v73
  %1115 = vmatprep.subr.mxu0 %v78
  %1116 = vmatpush1.msra.mxu0 %v77
  %1117 = vmatprep.subr.mxu0 %v82
  %1118 = vmatpush1.msra.mxu0 %v81
  %1119 = vmatprep.subr.mxu0 %v86
  %1120 = vmatpush1.msra.mxu0 %v85
  %1121 = vmatprep.subr.mxu0 %v90
  %1122 = vmatpush1.msra.mxu0 %v89
  %1123 = vmatprep.subr.mxu0 0.0
  %1124 = vmatpush1.msra.mxu0 0.0
  %1125 = vmatprep.subr.mxu0 0.0
  %1126 = vmatpush1.msra.mxu0 0.0
  %1127 = vmatprep.subr.mxu0 0.0
  %1128 = vmatpush1.msra.mxu0 0.0
  %1129 = vmatprep.subr.mxu0 0.0
  %1130 = vmatpush1.msra.mxu0 0.0
  %1131 = vmatprep.subr.mxu0 0.0
  %1132 = vmatpush1.msra.mxu0 0.0
  %1133 = vmatprep.subr.mxu0 0.0
  %1134 = vmatpush1.msra.mxu0 0.0
  %1135 = vmatprep.subr.mxu0 0.0
  %1136 = vmatpush1.msra.mxu0 0.0
  %1137 = vmatprep.subr.mxu0 0.0
  %1138 = vmatpush1.msra.mxu0 0.0
  %1139 = vmatprep.subr.mxu0 0.0
  %1140 = vmatpush1.msra.mxu0 0.0
  %1141 = vmatprep.subr.mxu0 0.0
  %1142 = vmatpush1.msra.mxu0 0.0
  %1143 = vmatprep.subr.mxu0 0.0
  %1144 = vmatpush1.msra.mxu0 0.0
  %1145 = vmatprep.subr.mxu0 0.0
  %1146 = vmatpush1.msra.mxu0 0.0
  %1147 = vmatprep.subr.mxu0 0.0
  %1148 = vmatpush1.msra.mxu0 0.0
  %1149 = vmatprep.subr.mxu0 0.0
  %1150 = vmatpush1.msra.mxu0 0.0
  %1151 = vmatprep.subr.mxu0 0.0
  %1152 = vmatpush1.msra.mxu0 0.0
  %1153 = vmatprep.subr.mxu0 0.0
  %1154 = vmatpush1.msra.mxu0 0.0
  %1155 = vmatprep.mubr.f32.mxu0 0.0
  %1156 = vmatmul.mubr.f32.gmra.mrb[0].mxu0 %v1005
  %v1157 = vpop.f32.mrb[0].mxu0
  %v1158 = vadd.f32 0.0, %v1157
  %v1159 = vpop.f32.mrb[0].mxu0
  %v1160 = vadd.f32 0.0, %v1159
  %1161 = vdwg.mxu0
  %v1162 = vadd.f32 %v1016, %v1087
  %v1163 = vadd.f32 %v1017, %v1089
  %v1164 = vadd.f32 %v1018, %v1158
  %v1165 = vadd.f32 %v1019, %v1160
  %v1166 = vxor.u32 %v1162, 2147483648
  %v1167 = vmul.f32 %v1166, 1.442695
  %v1168 = vpow.pop %v1167
  %v1169 = vadd.f32 %v1168, 1.0
  %v1170 = vrcp.pop %v1169
  %v1171 = vmul.f32 1.0, %v1170
  %v1172 = vxor.u32 %v1163, 2147483648
  %v1173 = vmul.f32 %v1172, 1.442695
  %v1174 = vpow.pop %v1173
  %v1175 = vadd.f32 %v1174, 1.0
  %v1176 = vrcp.pop %v1175
  %v1177 = vmul.f32 1.0, %v1176
  %v1178 = vtanh.pop %v1164
  %v1179 = vxor.u32 %v1165, 2147483648
  %v1180 = vmul.f32 %v1179, 1.442695
  %v1181 = vpow.pop %v1180
  %v1182 = vadd.f32 %v1181, 1.0
  %v1183 = vrcp.pop %v1182
  %v1184 = vmul.f32 1.0, %v1183
  %v1185 = vmul.f32 %v1177, %v1003
  %v1186 = vmul.f32 %v1171, %v1178
  %v1187 = vadd.f32 %v1185, %v1186
  %v1188 = vtanh.pop %v1187
  %v1189 = vmul.f32 %v1184, %v1188
  %s1190 = sadd.s32 %s92, 6
  %v1191 = vstv %s1190
  %vm1192 = vcmp.eq.s32.totalorder %v91, %v1191
  %v1193 = vsel %vm1192, 1, 0
  %1194 = vset.pattern.permute.xlu0 0
  %1195 = vperm.xlu0 %1194, %v1193
  %v1196 = vpop.permute.xlu0 %1195
  %vm1197 = vcmp.eq.s32.totalorder %v1196, 1
  %v1198 = vsel %vm1197, %v1189, %v1014
  %s1199 = scalar_lea.vmem %s1, 192
  %v1200 = vld [vmem:[%s1199] sm:$0xff]
  %v1201 = vld [vmem:[%s1199 + $0x8] sm:$0xff]
  %v1202 = vld [vmem:[%s1199 + $0x10] sm:$0xff]
  %v1203 = vld [vmem:[%s1199 + $0x18] sm:$0xff]
  %1204 = vmatprep.subr.mxu0 %v28
  %1205 = vmatpush1.msra.mxu0 %v27
  %1206 = vmatprep.subr.mxu0 %v32
  %1207 = vmatpush1.msra.mxu0 %v31
  %1208 = vmatprep.subr.mxu0 %v36
  %1209 = vmatpush1.msra.mxu0 %v35
  %1210 = vmatprep.subr.mxu0 %v40
  %1211 = vmatpush1.msra.mxu0 %v39
  %1212 = vmatprep.subr.mxu0 %v44
  %1213 = vmatpush1.msra.mxu0 %v43
  %1214 = vmatprep.subr.mxu0 %v48
  %1215 = vmatpush1.msra.mxu0 %v47
  %1216 = vmatprep.subr.mxu0 %v52
  %1217 = vmatpush1.msra.mxu0 %v51
  %1218 = vmatprep.subr.mxu0 %v56
  %1219 = vmatpush1.msra.mxu0 %v55
  %1220 = vmatprep.subr.mxu0 %v60
  %1221 = vmatpush1.msra.mxu0 %v59
  %1222 = vmatprep.subr.mxu0 %v64
  %1223 = vmatpush1.msra.mxu0 %v63
  %1224 = vmatprep.subr.mxu0 %v68
  %1225 = vmatpush1.msra.mxu0 %v67
  %1226 = vmatprep.subr.mxu0 %v72
  %1227 = vmatpush1.msra.mxu0 %v71
  %1228 = vmatprep.subr.mxu0 %v76
  %1229 = vmatpush1.msra.mxu0 %v75
  %1230 = vmatprep.subr.mxu0 %v80
  %1231 = vmatpush1.msra.mxu0 %v79
  %1232 = vmatprep.subr.mxu0 %v84
  %1233 = vmatpush1.msra.mxu0 %v83
  %1234 = vmatprep.subr.mxu0 %v88
  %1235 = vmatpush1.msra.mxu0 %v87
  %1236 = vmatprep.subr.mxu0 0.0
  %1237 = vmatpush1.msra.mxu0 0.0
  %1238 = vmatprep.subr.mxu0 0.0
  %1239 = vmatpush1.msra.mxu0 0.0
  %1240 = vmatprep.subr.mxu0 0.0
  %1241 = vmatpush1.msra.mxu0 0.0
  %1242 = vmatprep.subr.mxu0 0.0
  %1243 = vmatpush1.msra.mxu0 0.0
  %1244 = vmatprep.subr.mxu0 0.0
  %1245 = vmatpush1.msra.mxu0 0.0
  %1246 = vmatprep.subr.mxu0 0.0
  %1247 = vmatpush1.msra.mxu0 0.0
  %1248 = vmatprep.subr.mxu0 0.0
  %1249 = vmatpush1.msra.mxu0 0.0
  %1250 = vmatprep.subr.mxu0 0.0
  %1251 = vmatpush1.msra.mxu0 0.0
  %1252 = vmatprep.subr.mxu0 0.0
  %1253 = vmatpush1.msra.mxu0 0.0
  %1254 = vmatprep.subr.mxu0 0.0
  %1255 = vmatpush1.msra.mxu0 0.0
  %1256 = vmatprep.subr.mxu0 0.0
  %1257 = vmatpush1.msra.mxu0 0.0
  %1258 = vmatprep.subr.mxu0 0.0
  %1259 = vmatpush1.msra.mxu0 0.0
  %1260 = vmatprep.subr.mxu0 0.0
  %1261 = vmatpush1.msra.mxu0 0.0
  %1262 = vmatprep.subr.mxu0 0.0
  %1263 = vmatpush1.msra.mxu0 0.0
  %1264 = vmatprep.subr.mxu0 0.0
  %1265 = vmatpush1.msra.mxu0 0.0
  %1266 = vmatprep.subr.mxu0 0.0
  %1267 = vmatpush1.msra.mxu0 0.0
  %1268 = vmatprep.mubr.f32.mxu0 0.0
  %1269 = vmatmul.mubr.f32.gmra.mrb[0].mxu0 %v1189
  %v1270 = vpop.f32.mrb[0].mxu0
  %v1271 = vadd.f32 0.0, %v1270
  %v1272 = vpop.f32.mrb[0].mxu0
  %v1273 = vadd.f32 0.0, %v1272
  %1274 = vdwg.mxu0
  %1275 = vmatprep.subr.mxu0 %v30
  %1276 = vmatpush1.msra.mxu0 %v29
  %1277 = vmatprep.subr.mxu0 %v34
  %1278 = vmatpush1.msra.mxu0 %v33
  %1279 = vmatprep.subr.mxu0 %v38
  %1280 = vmatpush1.msra.mxu0 %v37
  %1281 = vmatprep.subr.mxu0 %v42
  %1282 = vmatpush1.msra.mxu0 %v41
  %1283 = vmatprep.subr.mxu0 %v46
  %1284 = vmatpush1.msra.mxu0 %v45
  %1285 = vmatprep.subr.mxu0 %v50
  %1286 = vmatpush1.msra.mxu0 %v49
  %1287 = vmatprep.subr.mxu0 %v54
  %1288 = vmatpush1.msra.mxu0 %v53
  %1289 = vmatprep.subr.mxu0 %v58
  %1290 = vmatpush1.msra.mxu0 %v57
  %1291 = vmatprep.subr.mxu0 %v62
  %1292 = vmatpush1.msra.mxu0 %v61
  %1293 = vmatprep.subr.mxu0 %v66
  %1294 = vmatpush1.msra.mxu0 %v65
  %1295 = vmatprep.subr.mxu0 %v70
  %1296 = vmatpush1.msra.mxu0 %v69
  %1297 = vmatprep.subr.mxu0 %v74
  %1298 = vmatpush1.msra.mxu0 %v73
  %1299 = vmatprep.subr.mxu0 %v78
  %1300 = vmatpush1.msra.mxu0 %v77
  %1301 = vmatprep.subr.mxu0 %v82
  %1302 = vmatpush1.msra.mxu0 %v81
  %1303 = vmatprep.subr.mxu0 %v86
  %1304 = vmatpush1.msra.mxu0 %v85
  %1305 = vmatprep.subr.mxu0 %v90
  %1306 = vmatpush1.msra.mxu0 %v89
  %1307 = vmatprep.subr.mxu0 0.0
  %1308 = vmatpush1.msra.mxu0 0.0
  %1309 = vmatprep.subr.mxu0 0.0
  %1310 = vmatpush1.msra.mxu0 0.0
  %1311 = vmatprep.subr.mxu0 0.0
  %1312 = vmatpush1.msra.mxu0 0.0
  %1313 = vmatprep.subr.mxu0 0.0
  %1314 = vmatpush1.msra.mxu0 0.0
  %1315 = vmatprep.subr.mxu0 0.0
  %1316 = vmatpush1.msra.mxu0 0.0
  %1317 = vmatprep.subr.mxu0 0.0
  %1318 = vmatpush1.msra.mxu0 0.0
  %1319 = vmatprep.subr.mxu0 0.0
  %1320 = vmatpush1.msra.mxu0 0.0
  %1321 = vmatprep.subr.mxu0 0.0
  %1322 = vmatpush1.msra.mxu0 0.0
  %1323 = vmatprep.subr.mxu0 0.0
  %1324 = vmatpush1.msra.mxu0 0.0
  %1325 = vmatprep.subr.mxu0 0.0
  %1326 = vmatpush1.msra.mxu0 0.0
  %1327 = vmatprep.subr.mxu0 0.0
  %1328 = vmatpush1.msra.mxu0 0.0
  %1329 = vmatprep.subr.mxu0 0.0
  %1330 = vmatpush1.msra.mxu0 0.0
  %1331 = vmatprep.subr.mxu0 0.0
  %1332 = vmatpush1.msra.mxu0 0.0
  %1333 = vmatprep.subr.mxu0 0.0
  %1334 = vmatpush1.msra.mxu0 0.0
  %1335 = vmatprep.subr.mxu0 0.0
  %1336 = vmatpush1.msra.mxu0 0.0
  %1337 = vmatprep.subr.mxu0 0.0
  %1338 = vmatpush1.msra.mxu0 0.0
  %1339 = vmatprep.mubr.f32.mxu0 0.0
  %1340 = vmatmul.mubr.f32.gmra.mrb[0].mxu0 %v1189
  %v1341 = vpop.f32.mrb[0].mxu0
  %v1342 = vadd.f32 0.0, %v1341
  %v1343 = vpop.f32.mrb[0].mxu0
  %v1344 = vadd.f32 0.0, %v1343
  %1345 = vdwg.mxu0
  %v1346 = vadd.f32 %v1200, %v1271
  %v1347 = vadd.f32 %v1201, %v1273
  %v1348 = vadd.f32 %v1202, %v1342
  %v1349 = vadd.f32 %v1203, %v1344
  %v1350 = vxor.u32 %v1346, 2147483648
  %v1351 = vmul.f32 %v1350, 1.442695
  %v1352 = vpow.pop %v1351
  %v1353 = vadd.f32 %v1352, 1.0
  %v1354 = vrcp.pop %v1353
  %v1355 = vmul.f32 1.0, %v1354
  %v1356 = vxor.u32 %v1347, 2147483648
  %v1357 = vmul.f32 %v1356, 1.442695
  %v1358 = vpow.pop %v1357
  %v1359 = vadd.f32 %v1358, 1.0
  %v1360 = vrcp.pop %v1359
  %v1361 = vmul.f32 1.0, %v1360
  %v1362 = vtanh.pop %v1348
  %v1363 = vxor.u32 %v1349, 2147483648
  %v1364 = vmul.f32 %v1363, 1.442695
  %v1365 = vpow.pop %v1364
  %v1366 = vadd.f32 %v1365, 1.0
  %v1367 = vrcp.pop %v1366
  %v1368 = vmul.f32 1.0, %v1367
  %v1369 = vmul.f32 %v1361, %v1187
  %v1370 = vmul.f32 %v1355, %v1362
  %v1371 = vadd.f32 %v1369, %v1370
  %v1372 = vtanh.pop %v1371
  %v1373 = vmul.f32 %v1368, %v1372
  %s1374 = sadd.s32 %s92, 7
  %v1375 = vstv %s1374
  %vm1376 = vcmp.eq.s32.totalorder %v91, %v1375
  %v1377 = vsel %vm1376, 1, 0
  %1378 = vset.pattern.permute.xlu0 0
  %1379 = vperm.xlu0 %1378, %v1377
  %v1380 = vpop.permute.xlu0 %1379
  %vm1381 = vcmp.eq.s32.totalorder %v1380, 1
  %v1382 = vsel %vm1381, %v1373, %v1198
  %s1383 = scalar_lea.vmem %s1, 224
  %v1384 = vld [vmem:[%s1383] sm:$0xff]
  %v1385 = vld [vmem:[%s1383 + $0x8] sm:$0xff]
  %v1386 = vld [vmem:[%s1383 + $0x10] sm:$0xff]
  %v1387 = vld [vmem:[%s1383 + $0x18] sm:$0xff]
  %1388 = vmatprep.subr.mxu0 %v28
  %1389 = vmatpush1.msra.mxu0 %v27
  %1390 = vmatprep.subr.mxu0 %v32
  %1391 = vmatpush1.msra.mxu0 %v31
  %1392 = vmatprep.subr.mxu0 %v36
  %1393 = vmatpush1.msra.mxu0 %v35
  %1394 = vmatprep.subr.mxu0 %v40
  %1395 = vmatpush1.msra.mxu0 %v39
  %1396 = vmatprep.subr.mxu0 %v44
  %1397 = vmatpush1.msra.mxu0 %v43
  %1398 = vmatprep.subr.mxu0 %v48
  %1399 = vmatpush1.msra.mxu0 %v47
  %1400 = vmatprep.subr.mxu0 %v52
  %1401 = vmatpush1.msra.mxu0 %v51
  %1402 = vmatprep.subr.mxu0 %v56
  %1403 = vmatpush1.msra.mxu0 %v55
  %1404 = vmatprep.subr.mxu0 %v60
  %1405 = vmatpush1.msra.mxu0 %v59
  %1406 = vmatprep.subr.mxu0 %v64
  %1407 = vmatpush1.msra.mxu0 %v63
  %1408 = vmatprep.subr.mxu0 %v68
  %1409 = vmatpush1.msra.mxu0 %v67
  %1410 = vmatprep.subr.mxu0 %v72
  %1411 = vmatpush1.msra.mxu0 %v71
  %1412 = vmatprep.subr.mxu0 %v76
  %1413 = vmatpush1.msra.mxu0 %v75
  %1414 = vmatprep.subr.mxu0 %v80
  %1415 = vmatpush1.msra.mxu0 %v79
  %1416 = vmatprep.subr.mxu0 %v84
  %1417 = vmatpush1.msra.mxu0 %v83
  %1418 = vmatprep.subr.mxu0 %v88
  %1419 = vmatpush1.msra.mxu0 %v87
  %1420 = vmatprep.subr.mxu0 0.0
  %1421 = vmatpush1.msra.mxu0 0.0
  %1422 = vmatprep.subr.mxu0 0.0
  %1423 = vmatpush1.msra.mxu0 0.0
  %1424 = vmatprep.subr.mxu0 0.0
  %1425 = vmatpush1.msra.mxu0 0.0
  %1426 = vmatprep.subr.mxu0 0.0
  %1427 = vmatpush1.msra.mxu0 0.0
  %1428 = vmatprep.subr.mxu0 0.0
  %1429 = vmatpush1.msra.mxu0 0.0
  %1430 = vmatprep.subr.mxu0 0.0
  %1431 = vmatpush1.msra.mxu0 0.0
  %1432 = vmatprep.subr.mxu0 0.0
  %1433 = vmatpush1.msra.mxu0 0.0
  %1434 = vmatprep.subr.mxu0 0.0
  %1435 = vmatpush1.msra.mxu0 0.0
  %1436 = vmatprep.subr.mxu0 0.0
  %1437 = vmatpush1.msra.mxu0 0.0
  %1438 = vmatprep.subr.mxu0 0.0
  %1439 = vmatpush1.msra.mxu0 0.0
  %1440 = vmatprep.subr.mxu0 0.0
  %1441 = vmatpush1.msra.mxu0 0.0
  %1442 = vmatprep.subr.mxu0 0.0
  %1443 = vmatpush1.msra.mxu0 0.0
  %1444 = vmatprep.subr.mxu0 0.0
  %1445 = vmatpush1.msra.mxu0 0.0
  %1446 = vmatprep.subr.mxu0 0.0
  %1447 = vmatpush1.msra.mxu0 0.0
  %1448 = vmatprep.subr.mxu0 0.0
  %1449 = vmatpush1.msra.mxu0 0.0
  %1450 = vmatprep.subr.mxu0 0.0
  %1451 = vmatpush1.msra.mxu0 0.0
  %1452 = vmatprep.mubr.f32.mxu0 0.0
  %1453 = vmatmul.mubr.f32.gmra.mrb[0].mxu0 %v1373
  %v1454 = vpop.f32.mrb[0].mxu0
  %v1455 = vadd.f32 0.0, %v1454
  %v1456 = vpop.f32.mrb[0].mxu0
  %v1457 = vadd.f32 0.0, %v1456
  %1458 = vdwg.mxu0
  %1459 = vmatprep.subr.mxu0 %v30
  %1460 = vmatpush1.msra.mxu0 %v29
  %1461 = vmatprep.subr.mxu0 %v34
  %1462 = vmatpush1.msra.mxu0 %v33
  %1463 = vmatprep.subr.mxu0 %v38
  %1464 = vmatpush1.msra.mxu0 %v37
  %1465 = vmatprep.subr.mxu0 %v42
  %1466 = vmatpush1.msra.mxu0 %v41
  %1467 = vmatprep.subr.mxu0 %v46
  %1468 = vmatpush1.msra.mxu0 %v45
  %1469 = vmatprep.subr.mxu0 %v50
  %1470 = vmatpush1.msra.mxu0 %v49
  %1471 = vmatprep.subr.mxu0 %v54
  %1472 = vmatpush1.msra.mxu0 %v53
  %1473 = vmatprep.subr.mxu0 %v58
  %1474 = vmatpush1.msra.mxu0 %v57
  %1475 = vmatprep.subr.mxu0 %v62
  %1476 = vmatpush1.msra.mxu0 %v61
  %1477 = vmatprep.subr.mxu0 %v66
  %1478 = vmatpush1.msra.mxu0 %v65
  %1479 = vmatprep.subr.mxu0 %v70
  %1480 = vmatpush1.msra.mxu0 %v69
  %1481 = vmatprep.subr.mxu0 %v74
  %1482 = vmatpush1.msra.mxu0 %v73
  %1483 = vmatprep.subr.mxu0 %v78
  %1484 = vmatpush1.msra.mxu0 %v77
  %1485 = vmatprep.subr.mxu0 %v82
  %1486 = vmatpush1.msra.mxu0 %v81
  %1487 = vmatprep.subr.mxu0 %v86
  %1488 = vmatpush1.msra.mxu0 %v85
  %1489 = vmatprep.subr.mxu0 %v90
  %1490 = vmatpush1.msra.mxu0 %v89
  %1491 = vmatprep.subr.mxu0 0.0
  %1492 = vmatpush1.msra.mxu0 0.0
  %1493 = vmatprep.subr.mxu0 0.0
  %1494 = vmatpush1.msra.mxu0 0.0
  %1495 = vmatprep.subr.mxu0 0.0
  %1496 = vmatpush1.msra.mxu0 0.0
  %1497 = vmatprep.subr.mxu0 0.0
  %1498 = vmatpush1.msra.mxu0 0.0
  %1499 = vmatprep.subr.mxu0 0.0
  %1500 = vmatpush1.msra.mxu0 0.0
  %1501 = vmatprep.subr.mxu0 0.0
  %1502 = vmatpush1.msra.mxu0 0.0
  %1503 = vmatprep.subr.mxu0 0.0
  %1504 = vmatpush1.msra.mxu0 0.0
  %1505 = vmatprep.subr.mxu0 0.0
  %1506 = vmatpush1.msra.mxu0 0.0
  %1507 = vmatprep.subr.mxu0 0.0
  %1508 = vmatpush1.msra.mxu0 0.0
  %1509 = vmatprep.subr.mxu0 0.0
  %1510 = vmatpush1.msra.mxu0 0.0
  %1511 = vmatprep.subr.mxu0 0.0
  %1512 = vmatpush1.msra.mxu0 0.0
  %1513 = vmatprep.subr.mxu0 0.0
  %1514 = vmatpush1.msra.mxu0 0.0
  %1515 = vmatprep.subr.mxu0 0.0
  %1516 = vmatpush1.msra.mxu0 0.0
  %1517 = vmatprep.subr.mxu0 0.0
  %1518 = vmatpush1.msra.mxu0 0.0
  %1519 = vmatprep.subr.mxu0 0.0
  %1520 = vmatpush1.msra.mxu0 0.0
  %1521 = vmatprep.subr.mxu0 0.0
  %1522 = vmatpush1.msra.mxu0 0.0
  %1523 = vmatprep.mubr.f32.mxu0 0.0
  %1524 = vmatmul.mubr.f32.gmra.mrb[0].mxu0 %v1373
  %v1525 = vpop.f32.mrb[0].mxu0
  %v1526 = vadd.f32 0.0, %v1525
  %v1527 = vpop.f32.mrb[0].mxu0
  %v1528 = vadd.f32 0.0, %v1527
  %1529 = vdwg.mxu0
  %v1530 = vadd.f32 %v1384, %v1455
  %v1531 = vadd.f32 %v1385, %v1457
  %v1532 = vadd.f32 %v1386, %v1526
  %v1533 = vadd.f32 %v1387, %v1528
  %v1534 = vxor.u32 %v1530, 2147483648
  %v1535 = vmul.f32 %v1534, 1.442695
  %v1536 = vpow.pop %v1535
  %v1537 = vadd.f32 %v1536, 1.0
  %v1538 = vrcp.pop %v1537
  %v1539 = vmul.f32 1.0, %v1538
  %v1540 = vxor.u32 %v1531, 2147483648
  %v1541 = vmul.f32 %v1540, 1.442695
  %v1542 = vpow.pop %v1541
  %v1543 = vadd.f32 %v1542, 1.0
  %v1544 = vrcp.pop %v1543
  %v1545 = vmul.f32 1.0, %v1544
  %v1546 = vtanh.pop %v1532
  %v1547 = vxor.u32 %v1533, 2147483648
  %v1548 = vmul.f32 %v1547, 1.442695
  %v1549 = vpow.pop %v1548
  %v1550 = vadd.f32 %v1549, 1.0
  %v1551 = vrcp.pop %v1550
  %v1552 = vmul.f32 1.0, %v1551
  %v1553 = vmul.f32 %v1545, %v1371
  %v1554 = vmul.f32 %v1539, %v1546
  %v1555 = vadd.f32 %v1553, %v1554
  %v1556 = vtanh.pop %v1555
  %v1557 = vmul.f32 %v1552, %v1556
  %s1558 = sadd.s32 %s92, 8
  %v1559 = vstv %s1558
  %vm1560 = vcmp.eq.s32.totalorder %v91, %v1559
  %v1561 = vsel %vm1560, 1, 0
  %1562 = vset.pattern.permute.xlu0 0
  %1563 = vperm.xlu0 %1562, %v1561
  %v1564 = vpop.permute.xlu0 %1563
  %vm1565 = vcmp.eq.s32.totalorder %v1564, 1
  %v1566 = vsel %vm1565, %v1557, %v1382
  %1567 = vst [vmem:[#allocation2] sm:$0xff] %v1557
  %1568 = vst [vmem:[#allocation3] sm:$0xff] %v1555
  %1569 = vst [vmem:[#allocation4] sm:$0xff] %v1566
  // Predicated region
  $region26: #{sentence_classifier_forward.1} parent=0 // pred_check
    %p1570 = pneg %p20
  $region27: #{sentence_classifier_forward.1} parent=0 // pred_check_branch
    %1572 = sbr.rel (%p1570) target = $region29
  $region28: #{sentence_classifier_forward.1} parent=0 // pred_region
    %v1573 = vld [vmem:[%s3] sm:$0xff]
    %v1574 = vld [vmem:[%s3 + $0x8] sm:$0xff]
    %v1575 = vld [vmem:[%s3 + $0x10] sm:$0xff]
    %v1576 = vld [vmem:[%s3 + $0x18] sm:$0xff]
    %v1577 = vld [vmem:[%s3 + $0x20] sm:$0xff]
    %v1578 = vld [vmem:[%s3 + $0x28] sm:$0xff]
    %v1579 = vld [vmem:[%s3 + $0x30] sm:$0xff]
    %v1580 = vld [vmem:[%s3 + $0x38] sm:$0xff]
    %v1581 = vld [vmem:[%s3 + $0x40] sm:$0xff]
    %v1582 = vld [vmem:[%s3 + $0x48] sm:$0xff]
    %v1583 = vld [vmem:[%s3 + $0x50] sm:$0xff]
    %v1584 = vld [vmem:[%s3 + $0x58] sm:$0xff]
    %v1585 = vld [vmem:[%s3 + $0x60] sm:$0xff]
    %v1586 = vld [vmem:[%s3 + $0x68] sm:$0xff]
    %v1587 = vld [vmem:[%s3 + $0x70] sm:$0xff]
    %v1588 = vld [vmem:[%s3 + $0x78] sm:$0xff]
    %v1589 = vld [vmem:[%s4] sm:$0x1]
    %v1591 = vlaneseq
    %v1592 = vshrl.u32 %v1591, 7
    %v1593 = vsub.s32 0, %v1592
    %v1594 = vrot.slane %v1589, %v1593
    %1596 = vmatprep.subr.mxu0 0.0
    %1597 = vmatpush1.msra.mxu0 %v1573
    %1598 = vmatprep.subr.mxu0 0.0
    %1599 = vmatpush1.msra.mxu0 %v1574
    %1600 = vmatprep.subr.mxu0 0.0
    %1601 = vmatpush1.msra.mxu0 %v1575
    %1602 = vmatprep.subr.mxu0 0.0
    %1603 = vmatpush1.msra.mxu0 %v1576
    %1604 = vmatprep.subr.mxu0 0.0
    %1605 = vmatpush1.msra.mxu0 %v1577
    %1606 = vmatprep.subr.mxu0 0.0
    %1607 = vmatpush1.msra.mxu0 %v1578
    %1608 = vmatprep.subr.mxu0 0.0
    %1609 = vmatpush1.msra.mxu0 %v1579
    %1610 = vmatprep.subr.mxu0 0.0
    %1611 = vmatpush1.msra.mxu0 %v1580
    %1612 = vmatprep.subr.mxu0 0.0
    %1613 = vmatpush1.msra.mxu0 %v1581
    %1614 = vmatprep.subr.mxu0 0.0
    %1615 = vmatpush1.msra.mxu0 %v1582
    %1616 = vmatprep.subr.mxu0 0.0
    %1617 = vmatpush1.msra.mxu0 %v1583
    %1618 = vmatprep.subr.mxu0 0.0
    %1619 = vmatpush1.msra.mxu0 %v1584
    %1620 = vmatprep.subr.mxu0 0.0
    %1621 = vmatpush1.msra.mxu0 %v1585
    %1622 = vmatprep.subr.mxu0 0.0
    %1623 = vmatpush1.msra.mxu0 %v1586
    %1624 = vmatprep.subr.mxu0 0.0
    %1625 = vmatpush1.msra.mxu0 %v1587
    %1626 = vmatprep.subr.mxu0 0.0
    %1627 = vmatpush1.msra.mxu0 %v1588
    %1628 = vmatprep.subr.mxu0 0.0
    %1629 = vmatpush1.msra.mxu0 0.0
    %1630 = vmatprep.subr.mxu0 0.0
    %1631 = vmatpush1.msra.mxu0 0.0
    %1632 = vmatprep.subr.mxu0 0.0
    %1633 = vmatpush1.msra.mxu0 0.0
    %1634 = vmatprep.subr.mxu0 0.0
    %1635 = vmatpush1.msra.mxu0 0.0
    %1636 = vmatprep.subr.mxu0 0.0
    %1637 = vmatpush1.msra.mxu0 0.0
    %1638 = vmatprep.subr.mxu0 0.0
    %1639 = vmatpush1.msra.mxu0 0.0
    %1640 = vmatprep.subr.mxu0 0.0
    %1641 = vmatpush1.msra.mxu0 0.0
    %1642 = vmatprep.subr.mxu0 0.0
    %1643 = vmatpush1.msra.mxu0 0.0
    %1644 = vmatprep.subr.mxu0 0.0
    %1645 = vmatpush1.msra.mxu0 0.0
    %1646 = vmatprep.subr.mxu0 0.0
    %1647 = vmatpush1.msra.mxu0 0.0
    %1648 = vmatprep.subr.mxu0 0.0
    %1649 = vmatpush1.msra.mxu0 0.0
    %1650 = vmatprep.subr.mxu0 0.0
    %1651 = vmatpush1.msra.mxu0 0.0
    %1652 = vmatprep.subr.mxu0 0.0
    %1653 = vmatpush1.msra.mxu0 0.0
    %1654 = vmatprep.subr.mxu0 0.0
    %1655 = vmatpush1.msra.mxu0 0.0
    %1656 = vmatprep.subr.mxu0 0.0
    %1657 = vmatpush1.msra.mxu0 0.0
    %1658 = vmatprep.subr.mxu0 0.0
    %1659 = vmatpush1.msra.mxu0 0.0
    %1660 = vmatprep.mubr.f32.mxu0 0.0
    %1661 = vmatmul.mubr.f32.gmra.mrb[0].mxu0 %v1566
    %v1662 = vpop.f32.mrb[0].mxu0
    %v1663 = vadd.f32 %v1594, %v1662
    %v1664 = vpop.f32.mrb[0].mxu0
    %1665 = vdwg.mxu0
    %1666 = vst [vmem:[%s5] sm:$0xff] %v1663
  $region29: #{sentence_classifier_forward.1} parent=0 // pred_fallthru
    _
  // Predicated region
  $region30: #{sentence_classifier_forward.1} parent=0 // pred_check
    _
  $region31: #{sentence_classifier_forward.1} parent=0 // pred_check_branch
    %1668 = sbr.rel (0) target = $region33
  $region32: #{sentence_classifier_forward.1} parent=0 // pred_region
    _
  $region33: #{sentence_classifier_forward.1} parent=0 // pred_fallthru
    _
  // Predicated region
  $region34: #{sentence_classifier_forward.1} parent=0 // pred_check
    _
  $region35: #{sentence_classifier_forward.1} parent=0 // pred_check_branch
    %1670 = sbr.rel (0) target = $region37
  $region36: #{sentence_classifier_forward.1} parent=0 // pred_region
    _
  $region37: #{sentence_classifier_forward.1} parent=0 // pred_fallthru
    _

</llo_original>
